<compile_context>
chip_gen: v5e
topology: v5e:2x2
jax: 0.10.0
libtpu: 0.0.40
codegen_flags: <defaults>
</compile_context>

<pallas_src>
import functools

import jax
import jax.numpy as jnp
import numpy as np
from jax.experimental import pallas as pl
from jax.experimental.pallas import tpu as pltpu


# ------------------------------------------------------------------
# Fused Pallas kernel: stacked LSTM layers (wavefront) + linear head
# ------------------------------------------------------------------
def _fused_lstm_kernel(*refs, num_layers, T, Bp, H):
    """refs = [x_flat, wih0, whh0, b0, (wcat, b) * (num_layers-1), fc_w, fc_b, out].

    x_flat : (T*Bp, IN)   time-major, batch padded to Bp (multiple of 8)
    wih0   : (IN, 4H)     layer-0 input->gates weights (pre-transposed, g-cols x2)
    whh0   : (H, 4H)      layer-0 hidden->gates weights (pre-transposed, g-cols x2)
    b0     : (1, 4H)      layer-0 b_ih + b_hh (g-cols x2)
    wcat   : (2H, 4H)     layers>0 fused [Whh; Wih] (pre-transposed, g-cols x2)
    b      : (1, 4H)      layers>0 b_ih + b_hh (g-cols x2)
    fc_w   : (1, H), fc_b : (1, 1)
    out    : (Bp, 1)
    """
    x_ref = refs[0]
    wih0_ref, whh0_ref, b0_ref = refs[1], refs[2], refs[3]
    idx = 4
    upper = []
    for _ in range(num_layers - 1):
        upper.append((refs[idx], refs[idx + 1]))
        idx += 2
    fcw_ref, fcb_ref = refs[idx], refs[idx + 1]
    out_ref = refs[idx + 2]

    # Hoisted layer-0 input projection: ONE batched MXU matmul over all T
    # timesteps; only the recurrence matmul stays on the serial chain.
    xg0 = jnp.dot(x_ref[...].astype(jnp.float32), wih0_ref[...],
                  preferred_element_type=jnp.float32) + b0_ref[...]   # (T*Bp, 4H)

    whh0 = whh0_ref[...]
    wcats = [w[...] for w, _ in upper]
    biases = [b[...] for _, b in upper]

    def cell(gates, c_prev):
        # g-gate pre-activations were scaled by 2 host-side, so a single
        # sigmoid over the full (Bp, 4H) tile suffices:
        #   tanh(z) = 2 * sigmoid(2z) - 1
        act = jax.nn.sigmoid(gates)
        i_g = act[:, 0 * H:1 * H]
        f_g = act[:, 1 * H:2 * H]
        g_g = 2.0 * act[:, 2 * H:3 * H] - 1.0
        o_g = act[:, 3 * H:4 * H]
        c_new = f_g * c_prev + i_g * g_g
        h_new = o_g * jnp.tanh(c_new)
        return h_new, c_new

    h = [jnp.zeros((Bp, H), jnp.float32) for _ in range(num_layers)]
    c = [jnp.zeros((Bp, H), jnp.float32) for _ in range(num_layers)]

    # Time-major wavefront: at step t, layer l>0 consumes the h just produced
    # by layer l-1, so the critical path is T + L - 1 cells (not T * L).
    for t in range(T):
        g0 = xg0[t * Bp:(t + 1) * Bp, :] + jnp.dot(
            h[0], whh0, preferred_element_type=jnp.float32)            # (Bp, 4H)
        h[0], c[0] = cell(g0, c[0])
        for l in range(1, num_layers):
            # Fused recurrence + input projection: one K=2H matmul per cell.
            lhs = jnp.concatenate([h[l], h[l - 1]], axis=1)             # (Bp, 2H)
            g = jnp.dot(lhs, wcats[l - 1],
                        preferred_element_type=jnp.float32) + biases[l - 1]
            h[l], c[l] = cell(g, c[l])

    # FC head (H -> 1): VPU broadcast-mul + XLU lane reduction; avoids an
    # N=1 MXU push/drain at the tail of the critical path.
    out_ref[...] = (
        jnp.sum(h[num_layers - 1] * fcw_ref[...], axis=-1, keepdims=True)
        + fcb_ref[...]
    ).astype(out_ref.dtype)


# ------------------------------------------------------------------
# Wrapper (matches LSTM.forward: batch_first input, (B, 1) output)
# ------------------------------------------------------------------
@jax.jit
def lstm_forward(x, prep):
    """x: (B, T, input_size) batch-first, like the PyTorch module."""
    B, T, IN = x.shape
    num_layers = 1 + len(prep["layers"])
    H = prep["whh0"].shape[0]
    Bp = ((B + 7) // 8) * 8                          # pad batch to sublane multiple

    x_flat = jnp.pad(x.astype(jnp.float32), ((0, Bp - B), (0, 0), (0, 0)))
    x_flat = jnp.transpose(x_flat, (1, 0, 2)).reshape(T * Bp, IN)   # time-major flat

    flat_args = [x_flat, prep["wih0"], prep["whh0"], prep["b0"]]
    for layer in prep["layers"]:
        flat_args += [layer["wcat"], layer["b"]]
    flat_args += [prep["fc_w"], prep["fc_b"]]

    # All arrays are small; each block equals the full array (legal for last
    # dims < 128 only because block == full dim).
    in_specs = [pl.BlockSpec(a.shape, lambda i: (0, 0)) for a in flat_args]

    kernel = functools.partial(
        _fused_lstm_kernel, num_layers=num_layers, T=T, Bp=Bp, H=H)

    out_p = pl.pallas_call(
        kernel,
        out_shape=jax.ShapeDtypeStruct((Bp, 1), jnp.float32),
        grid_spec=pltpu.PrefetchScalarGridSpec(
            num_scalar_prefetch=0,
            grid=(1,),                               # single fused grid step
            in_specs=in_specs,
            out_specs=pl.BlockSpec((Bp, 1), lambda i: (0, 0)),
        ),
        compiler_params=pltpu.CompilerParams(
            dimension_semantics=("arbitrary",)),
    )(*flat_args)
    return out_p[:B]


# ------------------------------------------------------------------
# Deterministic parameter init (matches nn.LSTM / nn.Linear shapes)
# ------------------------------------------------------------------
def init_params(key, input_size, hidden_size, num_layers):
    params = {"lstm": []}
    k = 1.0 / np.sqrt(hidden_size)
    for layer in range(num_layers):
        in_sz = input_size if layer == 0 else hidden_size
        key, k1, k2, k3, k4 = jax.random.split(key, 5)
        params["lstm"].append({
            "w_ih": jax.random.uniform(k1, (4 * hidden_size, in_sz), jnp.float32, -k, k),
            "w_hh": jax.random.uniform(k2, (4 * hidden_size, hidden_size), jnp.float32, -k, k),
            "b_ih": jax.random.uniform(k3, (4 * hidden_size,), jnp.float32, -k, k),
            "b_hh": jax.random.uniform(k4, (4 * hidden_size,), jnp.float32, -k, k),
        })
    key, k1, k2 = jax.random.split(key, 3)
    params["fc_w"] = jax.random.uniform(k1, (1, hidden_size), jnp.float32, -k, k)
    params["fc_b"] = jax.random.uniform(k2, (1,), jnp.float32, -k, k)
    return params


# ------------------------------------------------------------------
# Host-side weight prep for the kernel:
#   * transpose to (in, 4H) / (H, 4H)
#   * fuse b_ih + b_hh
#   * scale g-gate (columns [2H:3H], PyTorch i,f,g,o order) by 2 so the kernel
#     needs only one sigmoid over the (Bp, 4H) tile
#   * concatenate [Whh; Wih] -> (2H, 4H) for layers > 0 (K=2H fused matmul)
# ------------------------------------------------------------------
def prepare_params(raw):
    lstm = raw["lstm"]
    H = lstm[0]["w_hh"].shape[1]
    scale = jnp.ones((4 * H,), jnp.float32).at[2 * H:3 * H].set(2.0)

    l0 = lstm[0]
    prep = {
        "wih0": l0["w_ih"].T * scale[None, :],                     # (IN, 4H)
        "whh0": l0["w_hh"].T * scale[None, :],                     # (H, 4H)
        "b0": ((l0["b_ih"] + l0["b_hh"]) * scale)[None, :],        # (1, 4H)
        "layers": [],
        "fc_w": raw["fc_w"],                                       # (1, H)
        "fc_b": raw["fc_b"][None, :],                              # (1, 1)
    }
    for layer in lstm[1:]:
        whh_t = layer["w_hh"].T * scale[None, :]                   # (H, 4H)
        wih_t = layer["w_ih"].T * scale[None, :]                   # (H, 4H)
        prep["layers"].append({
            "wcat": jnp.concatenate([whh_t, wih_t], axis=0),       # (2H, 4H)
            "b": ((layer["b_ih"] + layer["b_hh"]) * scale)[None, :],
        })
    return prep


# ------------------------------------------------------------------
# Pure-JAX reference (correctness check; uses raw PyTorch-style params)
# ------------------------------------------------------------------
def lstm_forward_ref(x, raw):
    seq = x.astype(jnp.float32)
    B = x.shape[0]
    for layer in raw["lstm"]:
        H = layer["w_hh"].shape[1]
        h = jnp.zeros((B, H), jnp.float32)
        c = jnp.zeros((B, H), jnp.float32)
        outs = []
        for t in range(seq.shape[1]):
            gates = (seq[:, t, :] @ layer["w_ih"].T + h @ layer["w_hh"].T
                     + layer["b_ih"] + layer["b_hh"])
            i_g = jax.nn.sigmoid(gates[:, 0 * H:1 * H])
            f_g = jax.nn.sigmoid(gates[:, 1 * H:2 * H])
            g_g = jnp.tanh(gates[:, 2 * H:3 * H])
            o_g = jax.nn.sigmoid(gates[:, 3 * H:4 * H])
            c = f_g * c + i_g * g_g
            h = o_g * jnp.tanh(c)
            outs.append(h)
        seq = jnp.stack(outs, axis=1)
    return seq[:, -1, :] @ raw["fc_w"].T + raw["fc_b"]


# ------------------------------------------------------------------
# TODO(synk): the training pieces of the module (Adam optimizer, MSELoss,
# train/validate loops) are host-side PyTorch logic, not a forward op —
# only the forward pass is implemented as a kernel.
if __name__ == "__main__":
    input_size = 4
    hidden_size = 32
    num_stacked_layers = 2
    batch = 2
    seq_len = 8

    key = jax.random.PRNGKey(0)
    key, pkey, xkey = jax.random.split(key, 3)
    raw_params = init_params(pkey, input_size, hidden_size, num_stacked_layers)
    prep_params = prepare_params(raw_params)
    x = jax.random.normal(xkey, (batch, seq_len, input_size), jnp.float32)

    out = jax.block_until_ready(lstm_forward(x, prep_params))
    ref = jax.block_until_ready(lstm_forward_ref(x, raw_params))

    assert out.shape == (batch, 1), out.shape
    np.testing.assert_allclose(np.asarray(out), np.asarray(ref), rtol=1e-4, atol=1e-5)
    print("KERNEL_OK")
</pallas_src>

<mosaic_0001>
module attributes {stable_mosaic.version = 11 : i64} {
  func.func @_fused_lstm_kernel(%arg0: i32, %arg1: memref<64x4xf32, #tpu.memory_space<vmem>>, %arg2: memref<4x128xf32, #tpu.memory_space<vmem>>, %arg3: memref<32x128xf32, #tpu.memory_space<vmem>>, %arg4: memref<1x128xf32, #tpu.memory_space<vmem>>, %arg5: memref<64x128xf32, #tpu.memory_space<vmem>>, %arg6: memref<1x128xf32, #tpu.memory_space<vmem>>, %arg7: memref<1x32xf32, #tpu.memory_space<vmem>>, %arg8: memref<1x1xf32, #tpu.memory_space<vmem>>, %arg9: memref<8x1xf32, #tpu.memory_space<vmem>>) attributes {dimension_semantics = [#tpu.dimension_semantics<arbitrary>], iteration_bounds = array<i64: 1>, scalar_prefetch = 0 : i64, scratch_operands = 0 : i64, tpu.core_type = #tpu.core_type<tc>, window_params = [{pipeline_mode = #tpu.pipeline_mode<synchronous>, transform_indices = @transform_0, window_bounds = array<i64: 64, 4>}, {pipeline_mode = #tpu.pipeline_mode<synchronous>, transform_indices = @transform_1, window_bounds = array<i64: 4, 128>}, {pipeline_mode = #tpu.pipeline_mode<synchronous>, transform_indices = @transform_2, window_bounds = array<i64: 32, 128>}, {pipeline_mode = #tpu.pipeline_mode<synchronous>, transform_indices = @transform_3, window_bounds = array<i64: 1, 128>}, {pipeline_mode = #tpu.pipeline_mode<synchronous>, transform_indices = @transform_4, window_bounds = array<i64: 64, 128>}, {pipeline_mode = #tpu.pipeline_mode<synchronous>, transform_indices = @transform_5, window_bounds = array<i64: 1, 128>}, {pipeline_mode = #tpu.pipeline_mode<synchronous>, transform_indices = @transform_6, window_bounds = array<i64: 1, 32>}, {pipeline_mode = #tpu.pipeline_mode<synchronous>, transform_indices = @transform_7, window_bounds = array<i64: 1, 1>}, {pipeline_mode = #tpu.pipeline_mode<synchronous>, transform_indices = @transform_8, window_bounds = array<i64: 8, 1>}]} {
    %c0 = arith.constant 0 : index
    %c0_0 = arith.constant 0 : index
    %0 = vector.load %arg1[%c0, %c0_0] : memref<64x4xf32, #tpu.memory_space<vmem>>, vector<64x4xf32>
    %c0_1 = arith.constant 0 : index
    %c0_2 = arith.constant 0 : index
    %1 = vector.load %arg2[%c0_1, %c0_2] : memref<4x128xf32, #tpu.memory_space<vmem>>, vector<4x128xf32>
    %cst = arith.constant dense<0.000000e+00> : vector<64x128xf32>
    %2 = tpu.matmul %0, %1, %cst {dimension_numbers = #tpu.dot_dimension_numbers<[1], [0], [0], [1], [0, 0, 1, 1], [], []>} : vector<64x4xf32>, vector<4x128xf32>, vector<64x128xf32> -> vector<64x128xf32>
    %c0_3 = arith.constant 0 : index
    %c0_4 = arith.constant 0 : index
    %3 = vector.load %arg4[%c0_3, %c0_4] : memref<1x128xf32, #tpu.memory_space<vmem>>, vector<1x128xf32>
    %4 = vector.broadcast %3 : vector<1x128xf32> to vector<64x128xf32>
    %5 = arith.addf %2, %4 : vector<64x128xf32>
    %c0_5 = arith.constant 0 : index
    %c0_6 = arith.constant 0 : index
    %6 = vector.load %arg3[%c0_5, %c0_6] : memref<32x128xf32, #tpu.memory_space<vmem>>, vector<32x128xf32>
    %c0_7 = arith.constant 0 : index
    %c0_8 = arith.constant 0 : index
    %7 = vector.load %arg5[%c0_7, %c0_8] : memref<64x128xf32, #tpu.memory_space<vmem>>, vector<64x128xf32>
    %c0_9 = arith.constant 0 : index
    %c0_10 = arith.constant 0 : index
    %8 = vector.load %arg6[%c0_9, %c0_10] : memref<1x128xf32, #tpu.memory_space<vmem>>, vector<1x128xf32>
    %cst_11 = arith.constant 0.000000e+00 : f32
    %9 = vector.broadcast %cst_11 : f32 to vector<8x32xf32>
    %cst_12 = arith.constant 0.000000e+00 : f32
    %10 = vector.broadcast %cst_12 : f32 to vector<8x32xf32>
    %cst_13 = arith.constant 0.000000e+00 : f32
    %11 = vector.broadcast %cst_13 : f32 to vector<8x32xf32>
    %cst_14 = arith.constant 0.000000e+00 : f32
    %12 = vector.broadcast %cst_14 : f32 to vector<8x32xf32>
    %13 = vector.extract_strided_slice %5 {offsets = [0, 0], sizes = [8, 128], strides = [1, 1]} : vector<64x128xf32> to vector<8x128xf32>
    %cst_15 = arith.constant dense<0.000000e+00> : vector<8x128xf32>
    %14 = tpu.matmul %9, %6, %cst_15 {dimension_numbers = #tpu.dot_dimension_numbers<[1], [0], [0], [1], [0, 0, 1, 1], [], []>} : vector<8x32xf32>, vector<32x128xf32>, vector<8x128xf32> -> vector<8x128xf32>
    %15 = arith.addf %13, %14 : vector<8x128xf32>
    %16 = arith.negf %15 : vector<8x128xf32>
    %17 = math.exp %16 : vector<8x128xf32>
    %cst_16 = arith.constant 1.000000e+00 : f32
    %18 = vector.broadcast %cst_16 : f32 to vector<8x128xf32>
    %19 = arith.addf %18, %17 : vector<8x128xf32>
    %20 = arith.divf %18, %19 : vector<8x128xf32>
    %21 = vector.extract_strided_slice %20 {offsets = [0, 0], sizes = [8, 32], strides = [1, 1]} : vector<8x128xf32> to vector<8x32xf32>
    %22 = vector.extract_strided_slice %20 {offsets = [0, 32], sizes = [8, 32], strides = [1, 1]} : vector<8x128xf32> to vector<8x32xf32>
    %23 = vector.extract_strided_slice %20 {offsets = [0, 64], sizes = [8, 32], strides = [1, 1]} : vector<8x128xf32> to vector<8x32xf32>
    %cst_17 = arith.constant 2.000000e+00 : f32
    %24 = vector.broadcast %cst_17 : f32 to vector<8x32xf32>
    %25 = arith.mulf %24, %23 : vector<8x32xf32>
    %cst_18 = arith.constant 1.000000e+00 : f32
    %26 = vector.broadcast %cst_18 : f32 to vector<8x32xf32>
    %27 = arith.subf %25, %26 : vector<8x32xf32>
    %28 = vector.extract_strided_slice %20 {offsets = [0, 96], sizes = [8, 32], strides = [1, 1]} : vector<8x128xf32> to vector<8x32xf32>
    %29 = arith.mulf %22, %11 : vector<8x32xf32>
    %30 = arith.mulf %21, %27 : vector<8x32xf32>
    %31 = arith.addf %29, %30 : vector<8x32xf32>
    %32 = math.tanh %31 : vector<8x32xf32>
    %33 = arith.mulf %28, %32 : vector<8x32xf32>
    %34 = tpu.concatenate %10, %33 in 1 : vector<8x32xf32>, vector<8x32xf32> -> vector<8x64xf32>
    %cst_19 = arith.constant dense<0.000000e+00> : vector<8x128xf32>
    %35 = tpu.matmul %34, %7, %cst_19 {dimension_numbers = #tpu.dot_dimension_numbers<[1], [0], [0], [1], [0, 0, 1, 1], [], []>} : vector<8x64xf32>, vector<64x128xf32>, vector<8x128xf32> -> vector<8x128xf32>
    %36 = vector.broadcast %8 : vector<1x128xf32> to vector<8x128xf32>
    %37 = arith.addf %35, %36 : vector<8x128xf32>
    %38 = arith.negf %37 : vector<8x128xf32>
    %39 = math.exp %38 : vector<8x128xf32>
    %cst_20 = arith.constant 1.000000e+00 : f32
    %40 = vector.broadcast %cst_20 : f32 to vector<8x128xf32>
    %41 = arith.addf %40, %39 : vector<8x128xf32>
    %42 = arith.divf %40, %41 : vector<8x128xf32>
    %43 = vector.extract_strided_slice %42 {offsets = [0, 0], sizes = [8, 32], strides = [1, 1]} : vector<8x128xf32> to vector<8x32xf32>
    %44 = vector.extract_strided_slice %42 {offsets = [0, 32], sizes = [8, 32], strides = [1, 1]} : vector<8x128xf32> to vector<8x32xf32>
    %45 = vector.extract_strided_slice %42 {offsets = [0, 64], sizes = [8, 32], strides = [1, 1]} : vector<8x128xf32> to vector<8x32xf32>
    %cst_21 = arith.constant 2.000000e+00 : f32
    %46 = vector.broadcast %cst_21 : f32 to vector<8x32xf32>
    %47 = arith.mulf %46, %45 : vector<8x32xf32>
    %cst_22 = arith.constant 1.000000e+00 : f32
    %48 = vector.broadcast %cst_22 : f32 to vector<8x32xf32>
    %49 = arith.subf %47, %48 : vector<8x32xf32>
    %50 = vector.extract_strided_slice %42 {offsets = [0, 96], sizes = [8, 32], strides = [1, 1]} : vector<8x128xf32> to vector<8x32xf32>
    %51 = arith.mulf %44, %12 : vector<8x32xf32>
    %52 = arith.mulf %43, %49 : vector<8x32xf32>
    %53 = arith.addf %51, %52 : vector<8x32xf32>
    %54 = math.tanh %53 : vector<8x32xf32>
    %55 = arith.mulf %50, %54 : vector<8x32xf32>
    %56 = vector.extract_strided_slice %5 {offsets = [8, 0], sizes = [8, 128], strides = [1, 1]} : vector<64x128xf32> to vector<8x128xf32>
    %cst_23 = arith.constant dense<0.000000e+00> : vector<8x128xf32>
    %57 = tpu.matmul %33, %6, %cst_23 {dimension_numbers = #tpu.dot_dimension_numbers<[1], [0], [0], [1], [0, 0, 1, 1], [], []>} : vector<8x32xf32>, vector<32x128xf32>, vector<8x128xf32> -> vector<8x128xf32>
    %58 = arith.addf %56, %57 : vector<8x128xf32>
    %59 = arith.negf %58 : vector<8x128xf32>
    %60 = math.exp %59 : vector<8x128xf32>
    %cst_24 = arith.constant 1.000000e+00 : f32
    %61 = vector.broadcast %cst_24 : f32 to vector<8x128xf32>
    %62 = arith.addf %61, %60 : vector<8x128xf32>
    %63 = arith.divf %61, %62 : vector<8x128xf32>
    %64 = vector.extract_strided_slice %63 {offsets = [0, 0], sizes = [8, 32], strides = [1, 1]} : vector<8x128xf32> to vector<8x32xf32>
    %65 = vector.extract_strided_slice %63 {offsets = [0, 32], sizes = [8, 32], strides = [1, 1]} : vector<8x128xf32> to vector<8x32xf32>
    %66 = vector.extract_strided_slice %63 {offsets = [0, 64], sizes = [8, 32], strides = [1, 1]} : vector<8x128xf32> to vector<8x32xf32>
    %cst_25 = arith.constant 2.000000e+00 : f32
    %67 = vector.broadcast %cst_25 : f32 to vector<8x32xf32>
    %68 = arith.mulf %67, %66 : vector<8x32xf32>
    %cst_26 = arith.constant 1.000000e+00 : f32
    %69 = vector.broadcast %cst_26 : f32 to vector<8x32xf32>
    %70 = arith.subf %68, %69 : vector<8x32xf32>
    %71 = vector.extract_strided_slice %63 {offsets = [0, 96], sizes = [8, 32], strides = [1, 1]} : vector<8x128xf32> to vector<8x32xf32>
    %72 = arith.mulf %65, %31 : vector<8x32xf32>
    %73 = arith.mulf %64, %70 : vector<8x32xf32>
    %74 = arith.addf %72, %73 : vector<8x32xf32>
    %75 = math.tanh %74 : vector<8x32xf32>
    %76 = arith.mulf %71, %75 : vector<8x32xf32>
    %77 = tpu.concatenate %55, %76 in 1 : vector<8x32xf32>, vector<8x32xf32> -> vector<8x64xf32>
    %cst_27 = arith.constant dense<0.000000e+00> : vector<8x128xf32>
    %78 = tpu.matmul %77, %7, %cst_27 {dimension_numbers = #tpu.dot_dimension_numbers<[1], [0], [0], [1], [0, 0, 1, 1], [], []>} : vector<8x64xf32>, vector<64x128xf32>, vector<8x128xf32> -> vector<8x128xf32>
    %79 = vector.broadcast %8 : vector<1x128xf32> to vector<8x128xf32>
    %80 = arith.addf %78, %79 : vector<8x128xf32>
    %81 = arith.negf %80 : vector<8x128xf32>
    %82 = math.exp %81 : vector<8x128xf32>
    %cst_28 = arith.constant 1.000000e+00 : f32
    %83 = vector.broadcast %cst_28 : f32 to vector<8x128xf32>
    %84 = arith.addf %83, %82 : vector<8x128xf32>
    %85 = arith.divf %83, %84 : vector<8x128xf32>
    %86 = vector.extract_strided_slice %85 {offsets = [0, 0], sizes = [8, 32], strides = [1, 1]} : vector<8x128xf32> to vector<8x32xf32>
    %87 = vector.extract_strided_slice %85 {offsets = [0, 32], sizes = [8, 32], strides = [1, 1]} : vector<8x128xf32> to vector<8x32xf32>
    %88 = vector.extract_strided_slice %85 {offsets = [0, 64], sizes = [8, 32], strides = [1, 1]} : vector<8x128xf32> to vector<8x32xf32>
    %cst_29 = arith.constant 2.000000e+00 : f32
    %89 = vector.broadcast %cst_29 : f32 to vector<8x32xf32>
    %90 = arith.mulf %89, %88 : vector<8x32xf32>
    %cst_30 = arith.constant 1.000000e+00 : f32
    %91 = vector.broadcast %cst_30 : f32 to vector<8x32xf32>
    %92 = arith.subf %90, %91 : vector<8x32xf32>
    %93 = vector.extract_strided_slice %85 {offsets = [0, 96], sizes = [8, 32], strides = [1, 1]} : vector<8x128xf32> to vector<8x32xf32>
    %94 = arith.mulf %87, %53 : vector<8x32xf32>
    %95 = arith.mulf %86, %92 : vector<8x32xf32>
    %96 = arith.addf %94, %95 : vector<8x32xf32>
    %97 = math.tanh %96 : vector<8x32xf32>
    %98 = arith.mulf %93, %97 : vector<8x32xf32>
    %99 = vector.extract_strided_slice %5 {offsets = [16, 0], sizes = [8, 128], strides = [1, 1]} : vector<64x128xf32> to vector<8x128xf32>
    %cst_31 = arith.constant dense<0.000000e+00> : vector<8x128xf32>
    %100 = tpu.matmul %76, %6, %cst_31 {dimension_numbers = #tpu.dot_dimension_numbers<[1], [0], [0], [1], [0, 0, 1, 1], [], []>} : vector<8x32xf32>, vector<32x128xf32>, vector<8x128xf32> -> vector<8x128xf32>
    %101 = arith.addf %99, %100 : vector<8x128xf32>
    %102 = arith.negf %101 : vector<8x128xf32>
    %103 = math.exp %102 : vector<8x128xf32>
    %cst_32 = arith.constant 1.000000e+00 : f32
    %104 = vector.broadcast %cst_32 : f32 to vector<8x128xf32>
    %105 = arith.addf %104, %103 : vector<8x128xf32>
    %106 = arith.divf %104, %105 : vector<8x128xf32>
    %107 = vector.extract_strided_slice %106 {offsets = [0, 0], sizes = [8, 32], strides = [1, 1]} : vector<8x128xf32> to vector<8x32xf32>
    %108 = vector.extract_strided_slice %106 {offsets = [0, 32], sizes = [8, 32], strides = [1, 1]} : vector<8x128xf32> to vector<8x32xf32>
    %109 = vector.extract_strided_slice %106 {offsets = [0, 64], sizes = [8, 32], strides = [1, 1]} : vector<8x128xf32> to vector<8x32xf32>
    %cst_33 = arith.constant 2.000000e+00 : f32
    %110 = vector.broadcast %cst_33 : f32 to vector<8x32xf32>
    %111 = arith.mulf %110, %109 : vector<8x32xf32>
    %cst_34 = arith.constant 1.000000e+00 : f32
    %112 = vector.broadcast %cst_34 : f32 to vector<8x32xf32>
    %113 = arith.subf %111, %112 : vector<8x32xf32>
    %114 = vector.extract_strided_slice %106 {offsets = [0, 96], sizes = [8, 32], strides = [1, 1]} : vector<8x128xf32> to vector<8x32xf32>
    %115 = arith.mulf %108, %74 : vector<8x32xf32>
    %116 = arith.mulf %107, %113 : vector<8x32xf32>
    %117 = arith.addf %115, %116 : vector<8x32xf32>
    %118 = math.tanh %117 : vector<8x32xf32>
    %119 = arith.mulf %114, %118 : vector<8x32xf32>
    %120 = tpu.concatenate %98, %119 in 1 : vector<8x32xf32>, vector<8x32xf32> -> vector<8x64xf32>
    %cst_35 = arith.constant dense<0.000000e+00> : vector<8x128xf32>
    %121 = tpu.matmul %120, %7, %cst_35 {dimension_numbers = #tpu.dot_dimension_numbers<[1], [0], [0], [1], [0, 0, 1, 1], [], []>} : vector<8x64xf32>, vector<64x128xf32>, vector<8x128xf32> -> vector<8x128xf32>
    %122 = vector.broadcast %8 : vector<1x128xf32> to vector<8x128xf32>
    %123 = arith.addf %121, %122 : vector<8x128xf32>
    %124 = arith.negf %123 : vector<8x128xf32>
    %125 = math.exp %124 : vector<8x128xf32>
    %cst_36 = arith.constant 1.000000e+00 : f32
    %126 = vector.broadcast %cst_36 : f32 to vector<8x128xf32>
    %127 = arith.addf %126, %125 : vector<8x128xf32>
    %128 = arith.divf %126, %127 : vector<8x128xf32>
    %129 = vector.extract_strided_slice %128 {offsets = [0, 0], sizes = [8, 32], strides = [1, 1]} : vector<8x128xf32> to vector<8x32xf32>
    %130 = vector.extract_strided_slice %128 {offsets = [0, 32], sizes = [8, 32], strides = [1, 1]} : vector<8x128xf32> to vector<8x32xf32>
    %131 = vector.extract_strided_slice %128 {offsets = [0, 64], sizes = [8, 32], strides = [1, 1]} : vector<8x128xf32> to vector<8x32xf32>
    %cst_37 = arith.constant 2.000000e+00 : f32
    %132 = vector.broadcast %cst_37 : f32 to vector<8x32xf32>
    %133 = arith.mulf %132, %131 : vector<8x32xf32>
    %cst_38 = arith.constant 1.000000e+00 : f32
    %134 = vector.broadcast %cst_38 : f32 to vector<8x32xf32>
    %135 = arith.subf %133, %134 : vector<8x32xf32>
    %136 = vector.extract_strided_slice %128 {offsets = [0, 96], sizes = [8, 32], strides = [1, 1]} : vector<8x128xf32> to vector<8x32xf32>
    %137 = arith.mulf %130, %96 : vector<8x32xf32>
    %138 = arith.mulf %129, %135 : vector<8x32xf32>
    %139 = arith.addf %137, %138 : vector<8x32xf32>
    %140 = math.tanh %139 : vector<8x32xf32>
    %141 = arith.mulf %136, %140 : vector<8x32xf32>
    %142 = vector.extract_strided_slice %5 {offsets = [24, 0], sizes = [8, 128], strides = [1, 1]} : vector<64x128xf32> to vector<8x128xf32>
    %cst_39 = arith.constant dense<0.000000e+00> : vector<8x128xf32>
    %143 = tpu.matmul %119, %6, %cst_39 {dimension_numbers = #tpu.dot_dimension_numbers<[1], [0], [0], [1], [0, 0, 1, 1], [], []>} : vector<8x32xf32>, vector<32x128xf32>, vector<8x128xf32> -> vector<8x128xf32>
    %144 = arith.addf %142, %143 : vector<8x128xf32>
    %145 = arith.negf %144 : vector<8x128xf32>
    %146 = math.exp %145 : vector<8x128xf32>
    %cst_40 = arith.constant 1.000000e+00 : f32
    %147 = vector.broadcast %cst_40 : f32 to vector<8x128xf32>
    %148 = arith.addf %147, %146 : vector<8x128xf32>
    %149 = arith.divf %147, %148 : vector<8x128xf32>
    %150 = vector.extract_strided_slice %149 {offsets = [0, 0], sizes = [8, 32], strides = [1, 1]} : vector<8x128xf32> to vector<8x32xf32>
    %151 = vector.extract_strided_slice %149 {offsets = [0, 32], sizes = [8, 32], strides = [1, 1]} : vector<8x128xf32> to vector<8x32xf32>
    %152 = vector.extract_strided_slice %149 {offsets = [0, 64], sizes = [8, 32], strides = [1, 1]} : vector<8x128xf32> to vector<8x32xf32>
    %cst_41 = arith.constant 2.000000e+00 : f32
    %153 = vector.broadcast %cst_41 : f32 to vector<8x32xf32>
    %154 = arith.mulf %153, %152 : vector<8x32xf32>
    %cst_42 = arith.constant 1.000000e+00 : f32
    %155 = vector.broadcast %cst_42 : f32 to vector<8x32xf32>
    %156 = arith.subf %154, %155 : vector<8x32xf32>
    %157 = vector.extract_strided_slice %149 {offsets = [0, 96], sizes = [8, 32], strides = [1, 1]} : vector<8x128xf32> to vector<8x32xf32>
    %158 = arith.mulf %151, %117 : vector<8x32xf32>
    %159 = arith.mulf %150, %156 : vector<8x32xf32>
    %160 = arith.addf %158, %159 : vector<8x32xf32>
    %161 = math.tanh %160 : vector<8x32xf32>
    %162 = arith.mulf %157, %161 : vector<8x32xf32>
    %163 = tpu.concatenate %141, %162 in 1 : vector<8x32xf32>, vector<8x32xf32> -> vector<8x64xf32>
    %cst_43 = arith.constant dense<0.000000e+00> : vector<8x128xf32>
    %164 = tpu.matmul %163, %7, %cst_43 {dimension_numbers = #tpu.dot_dimension_numbers<[1], [0], [0], [1], [0, 0, 1, 1], [], []>} : vector<8x64xf32>, vector<64x128xf32>, vector<8x128xf32> -> vector<8x128xf32>
    %165 = vector.broadcast %8 : vector<1x128xf32> to vector<8x128xf32>
    %166 = arith.addf %164, %165 : vector<8x128xf32>
    %167 = arith.negf %166 : vector<8x128xf32>
    %168 = math.exp %167 : vector<8x128xf32>
    %cst_44 = arith.constant 1.000000e+00 : f32
    %169 = vector.broadcast %cst_44 : f32 to vector<8x128xf32>
    %170 = arith.addf %169, %168 : vector<8x128xf32>
    %171 = arith.divf %169, %170 : vector<8x128xf32>
    %172 = vector.extract_strided_slice %171 {offsets = [0, 0], sizes = [8, 32], strides = [1, 1]} : vector<8x128xf32> to vector<8x32xf32>
    %173 = vector.extract_strided_slice %171 {offsets = [0, 32], sizes = [8, 32], strides = [1, 1]} : vector<8x128xf32> to vector<8x32xf32>
    %174 = vector.extract_strided_slice %171 {offsets = [0, 64], sizes = [8, 32], strides = [1, 1]} : vector<8x128xf32> to vector<8x32xf32>
    %cst_45 = arith.constant 2.000000e+00 : f32
    %175 = vector.broadcast %cst_45 : f32 to vector<8x32xf32>
    %176 = arith.mulf %175, %174 : vector<8x32xf32>
    %cst_46 = arith.constant 1.000000e+00 : f32
    %177 = vector.broadcast %cst_46 : f32 to vector<8x32xf32>
    %178 = arith.subf %176, %177 : vector<8x32xf32>
    %179 = vector.extract_strided_slice %171 {offsets = [0, 96], sizes = [8, 32], strides = [1, 1]} : vector<8x128xf32> to vector<8x32xf32>
    %180 = arith.mulf %173, %139 : vector<8x32xf32>
    %181 = arith.mulf %172, %178 : vector<8x32xf32>
    %182 = arith.addf %180, %181 : vector<8x32xf32>
    %183 = math.tanh %182 : vector<8x32xf32>
    %184 = arith.mulf %179, %183 : vector<8x32xf32>
    %185 = vector.extract_strided_slice %5 {offsets = [32, 0], sizes = [8, 128], strides = [1, 1]} : vector<64x128xf32> to vector<8x128xf32>
    %cst_47 = arith.constant dense<0.000000e+00> : vector<8x128xf32>
    %186 = tpu.matmul %162, %6, %cst_47 {dimension_numbers = #tpu.dot_dimension_numbers<[1], [0], [0], [1], [0, 0, 1, 1], [], []>} : vector<8x32xf32>, vector<32x128xf32>, vector<8x128xf32> -> vector<8x128xf32>
    %187 = arith.addf %185, %186 : vector<8x128xf32>
    %188 = arith.negf %187 : vector<8x128xf32>
    %189 = math.exp %188 : vector<8x128xf32>
    %cst_48 = arith.constant 1.000000e+00 : f32
    %190 = vector.broadcast %cst_48 : f32 to vector<8x128xf32>
    %191 = arith.addf %190, %189 : vector<8x128xf32>
    %192 = arith.divf %190, %191 : vector<8x128xf32>
    %193 = vector.extract_strided_slice %192 {offsets = [0, 0], sizes = [8, 32], strides = [1, 1]} : vector<8x128xf32> to vector<8x32xf32>
    %194 = vector.extract_strided_slice %192 {offsets = [0, 32], sizes = [8, 32], strides = [1, 1]} : vector<8x128xf32> to vector<8x32xf32>
    %195 = vector.extract_strided_slice %192 {offsets = [0, 64], sizes = [8, 32], strides = [1, 1]} : vector<8x128xf32> to vector<8x32xf32>
    %cst_49 = arith.constant 2.000000e+00 : f32
    %196 = vector.broadcast %cst_49 : f32 to vector<8x32xf32>
    %197 = arith.mulf %196, %195 : vector<8x32xf32>
    %cst_50 = arith.constant 1.000000e+00 : f32
    %198 = vector.broadcast %cst_50 : f32 to vector<8x32xf32>
    %199 = arith.subf %197, %198 : vector<8x32xf32>
    %200 = vector.extract_strided_slice %192 {offsets = [0, 96], sizes = [8, 32], strides = [1, 1]} : vector<8x128xf32> to vector<8x32xf32>
    %201 = arith.mulf %194, %160 : vector<8x32xf32>
    %202 = arith.mulf %193, %199 : vector<8x32xf32>
    %203 = arith.addf %201, %202 : vector<8x32xf32>
    %204 = math.tanh %203 : vector<8x32xf32>
    %205 = arith.mulf %200, %204 : vector<8x32xf32>
    %206 = tpu.concatenate %184, %205 in 1 : vector<8x32xf32>, vector<8x32xf32> -> vector<8x64xf32>
    %cst_51 = arith.constant dense<0.000000e+00> : vector<8x128xf32>
    %207 = tpu.matmul %206, %7, %cst_51 {dimension_numbers = #tpu.dot_dimension_numbers<[1], [0], [0], [1], [0, 0, 1, 1], [], []>} : vector<8x64xf32>, vector<64x128xf32>, vector<8x128xf32> -> vector<8x128xf32>
    %208 = vector.broadcast %8 : vector<1x128xf32> to vector<8x128xf32>
    %209 = arith.addf %207, %208 : vector<8x128xf32>
    %210 = arith.negf %209 : vector<8x128xf32>
    %211 = math.exp %210 : vector<8x128xf32>
    %cst_52 = arith.constant 1.000000e+00 : f32
    %212 = vector.broadcast %cst_52 : f32 to vector<8x128xf32>
    %213 = arith.addf %212, %211 : vector<8x128xf32>
    %214 = arith.divf %212, %213 : vector<8x128xf32>
    %215 = vector.extract_strided_slice %214 {offsets = [0, 0], sizes = [8, 32], strides = [1, 1]} : vector<8x128xf32> to vector<8x32xf32>
    %216 = vector.extract_strided_slice %214 {offsets = [0, 32], sizes = [8, 32], strides = [1, 1]} : vector<8x128xf32> to vector<8x32xf32>
    %217 = vector.extract_strided_slice %214 {offsets = [0, 64], sizes = [8, 32], strides = [1, 1]} : vector<8x128xf32> to vector<8x32xf32>
    %cst_53 = arith.constant 2.000000e+00 : f32
    %218 = vector.broadcast %cst_53 : f32 to vector<8x32xf32>
    %219 = arith.mulf %218, %217 : vector<8x32xf32>
    %cst_54 = arith.constant 1.000000e+00 : f32
    %220 = vector.broadcast %cst_54 : f32 to vector<8x32xf32>
    %221 = arith.subf %219, %220 : vector<8x32xf32>
    %222 = vector.extract_strided_slice %214 {offsets = [0, 96], sizes = [8, 32], strides = [1, 1]} : vector<8x128xf32> to vector<8x32xf32>
    %223 = arith.mulf %216, %182 : vector<8x32xf32>
    %224 = arith.mulf %215, %221 : vector<8x32xf32>
    %225 = arith.addf %223, %224 : vector<8x32xf32>
    %226 = math.tanh %225 : vector<8x32xf32>
    %227 = arith.mulf %222, %226 : vector<8x32xf32>
    %228 = vector.extract_strided_slice %5 {offsets = [40, 0], sizes = [8, 128], strides = [1, 1]} : vector<64x128xf32> to vector<8x128xf32>
    %cst_55 = arith.constant dense<0.000000e+00> : vector<8x128xf32>
    %229 = tpu.matmul %205, %6, %cst_55 {dimension_numbers = #tpu.dot_dimension_numbers<[1], [0], [0], [1], [0, 0, 1, 1], [], []>} : vector<8x32xf32>, vector<32x128xf32>, vector<8x128xf32> -> vector<8x128xf32>
    %230 = arith.addf %228, %229 : vector<8x128xf32>
    %231 = arith.negf %230 : vector<8x128xf32>
    %232 = math.exp %231 : vector<8x128xf32>
    %cst_56 = arith.constant 1.000000e+00 : f32
    %233 = vector.broadcast %cst_56 : f32 to vector<8x128xf32>
    %234 = arith.addf %233, %232 : vector<8x128xf32>
    %235 = arith.divf %233, %234 : vector<8x128xf32>
    %236 = vector.extract_strided_slice %235 {offsets = [0, 0], sizes = [8, 32], strides = [1, 1]} : vector<8x128xf32> to vector<8x32xf32>
    %237 = vector.extract_strided_slice %235 {offsets = [0, 32], sizes = [8, 32], strides = [1, 1]} : vector<8x128xf32> to vector<8x32xf32>
    %238 = vector.extract_strided_slice %235 {offsets = [0, 64], sizes = [8, 32], strides = [1, 1]} : vector<8x128xf32> to vector<8x32xf32>
    %cst_57 = arith.constant 2.000000e+00 : f32
    %239 = vector.broadcast %cst_57 : f32 to vector<8x32xf32>
    %240 = arith.mulf %239, %238 : vector<8x32xf32>
    %cst_58 = arith.constant 1.000000e+00 : f32
    %241 = vector.broadcast %cst_58 : f32 to vector<8x32xf32>
    %242 = arith.subf %240, %241 : vector<8x32xf32>
    %243 = vector.extract_strided_slice %235 {offsets = [0, 96], sizes = [8, 32], strides = [1, 1]} : vector<8x128xf32> to vector<8x32xf32>
    %244 = arith.mulf %237, %203 : vector<8x32xf32>
    %245 = arith.mulf %236, %242 : vector<8x32xf32>
    %246 = arith.addf %244, %245 : vector<8x32xf32>
    %247 = math.tanh %246 : vector<8x32xf32>
    %248 = arith.mulf %243, %247 : vector<8x32xf32>
    %249 = tpu.concatenate %227, %248 in 1 : vector<8x32xf32>, vector<8x32xf32> -> vector<8x64xf32>
    %cst_59 = arith.constant dense<0.000000e+00> : vector<8x128xf32>
    %250 = tpu.matmul %249, %7, %cst_59 {dimension_numbers = #tpu.dot_dimension_numbers<[1], [0], [0], [1], [0, 0, 1, 1], [], []>} : vector<8x64xf32>, vector<64x128xf32>, vector<8x128xf32> -> vector<8x128xf32>
    %251 = vector.broadcast %8 : vector<1x128xf32> to vector<8x128xf32>
    %252 = arith.addf %250, %251 : vector<8x128xf32>
    %253 = arith.negf %252 : vector<8x128xf32>
    %254 = math.exp %253 : vector<8x128xf32>
    %cst_60 = arith.constant 1.000000e+00 : f32
    %255 = vector.broadcast %cst_60 : f32 to vector<8x128xf32>
    %256 = arith.addf %255, %254 : vector<8x128xf32>
    %257 = arith.divf %255, %256 : vector<8x128xf32>
    %258 = vector.extract_strided_slice %257 {offsets = [0, 0], sizes = [8, 32], strides = [1, 1]} : vector<8x128xf32> to vector<8x32xf32>
    %259 = vector.extract_strided_slice %257 {offsets = [0, 32], sizes = [8, 32], strides = [1, 1]} : vector<8x128xf32> to vector<8x32xf32>
    %260 = vector.extract_strided_slice %257 {offsets = [0, 64], sizes = [8, 32], strides = [1, 1]} : vector<8x128xf32> to vector<8x32xf32>
    %cst_61 = arith.constant 2.000000e+00 : f32
    %261 = vector.broadcast %cst_61 : f32 to vector<8x32xf32>
    %262 = arith.mulf %261, %260 : vector<8x32xf32>
    %cst_62 = arith.constant 1.000000e+00 : f32
    %263 = vector.broadcast %cst_62 : f32 to vector<8x32xf32>
    %264 = arith.subf %262, %263 : vector<8x32xf32>
    %265 = vector.extract_strided_slice %257 {offsets = [0, 96], sizes = [8, 32], strides = [1, 1]} : vector<8x128xf32> to vector<8x32xf32>
    %266 = arith.mulf %259, %225 : vector<8x32xf32>
    %267 = arith.mulf %258, %264 : vector<8x32xf32>
    %268 = arith.addf %266, %267 : vector<8x32xf32>
    %269 = math.tanh %268 : vector<8x32xf32>
    %270 = arith.mulf %265, %269 : vector<8x32xf32>
    %271 = vector.extract_strided_slice %5 {offsets = [48, 0], sizes = [8, 128], strides = [1, 1]} : vector<64x128xf32> to vector<8x128xf32>
    %cst_63 = arith.constant dense<0.000000e+00> : vector<8x128xf32>
    %272 = tpu.matmul %248, %6, %cst_63 {dimension_numbers = #tpu.dot_dimension_numbers<[1], [0], [0], [1], [0, 0, 1, 1], [], []>} : vector<8x32xf32>, vector<32x128xf32>, vector<8x128xf32> -> vector<8x128xf32>
    %273 = arith.addf %271, %272 : vector<8x128xf32>
    %274 = arith.negf %273 : vector<8x128xf32>
    %275 = math.exp %274 : vector<8x128xf32>
    %cst_64 = arith.constant 1.000000e+00 : f32
    %276 = vector.broadcast %cst_64 : f32 to vector<8x128xf32>
    %277 = arith.addf %276, %275 : vector<8x128xf32>
    %278 = arith.divf %276, %277 : vector<8x128xf32>
    %279 = vector.extract_strided_slice %278 {offsets = [0, 0], sizes = [8, 32], strides = [1, 1]} : vector<8x128xf32> to vector<8x32xf32>
    %280 = vector.extract_strided_slice %278 {offsets = [0, 32], sizes = [8, 32], strides = [1, 1]} : vector<8x128xf32> to vector<8x32xf32>
    %281 = vector.extract_strided_slice %278 {offsets = [0, 64], sizes = [8, 32], strides = [1, 1]} : vector<8x128xf32> to vector<8x32xf32>
    %cst_65 = arith.constant 2.000000e+00 : f32
    %282 = vector.broadcast %cst_65 : f32 to vector<8x32xf32>
    %283 = arith.mulf %282, %281 : vector<8x32xf32>
    %cst_66 = arith.constant 1.000000e+00 : f32
    %284 = vector.broadcast %cst_66 : f32 to vector<8x32xf32>
    %285 = arith.subf %283, %284 : vector<8x32xf32>
    %286 = vector.extract_strided_slice %278 {offsets = [0, 96], sizes = [8, 32], strides = [1, 1]} : vector<8x128xf32> to vector<8x32xf32>
    %287 = arith.mulf %280, %246 : vector<8x32xf32>
    %288 = arith.mulf %279, %285 : vector<8x32xf32>
    %289 = arith.addf %287, %288 : vector<8x32xf32>
    %290 = math.tanh %289 : vector<8x32xf32>
    %291 = arith.mulf %286, %290 : vector<8x32xf32>
    %292 = tpu.concatenate %270, %291 in 1 : vector<8x32xf32>, vector<8x32xf32> -> vector<8x64xf32>
    %cst_67 = arith.constant dense<0.000000e+00> : vector<8x128xf32>
    %293 = tpu.matmul %292, %7, %cst_67 {dimension_numbers = #tpu.dot_dimension_numbers<[1], [0], [0], [1], [0, 0, 1, 1], [], []>} : vector<8x64xf32>, vector<64x128xf32>, vector<8x128xf32> -> vector<8x128xf32>
    %294 = vector.broadcast %8 : vector<1x128xf32> to vector<8x128xf32>
    %295 = arith.addf %293, %294 : vector<8x128xf32>
    %296 = arith.negf %295 : vector<8x128xf32>
    %297 = math.exp %296 : vector<8x128xf32>
    %cst_68 = arith.constant 1.000000e+00 : f32
    %298 = vector.broadcast %cst_68 : f32 to vector<8x128xf32>
    %299 = arith.addf %298, %297 : vector<8x128xf32>
    %300 = arith.divf %298, %299 : vector<8x128xf32>
    %301 = vector.extract_strided_slice %300 {offsets = [0, 0], sizes = [8, 32], strides = [1, 1]} : vector<8x128xf32> to vector<8x32xf32>
    %302 = vector.extract_strided_slice %300 {offsets = [0, 32], sizes = [8, 32], strides = [1, 1]} : vector<8x128xf32> to vector<8x32xf32>
    %303 = vector.extract_strided_slice %300 {offsets = [0, 64], sizes = [8, 32], strides = [1, 1]} : vector<8x128xf32> to vector<8x32xf32>
    %cst_69 = arith.constant 2.000000e+00 : f32
    %304 = vector.broadcast %cst_69 : f32 to vector<8x32xf32>
    %305 = arith.mulf %304, %303 : vector<8x32xf32>
    %cst_70 = arith.constant 1.000000e+00 : f32
    %306 = vector.broadcast %cst_70 : f32 to vector<8x32xf32>
    %307 = arith.subf %305, %306 : vector<8x32xf32>
    %308 = vector.extract_strided_slice %300 {offsets = [0, 96], sizes = [8, 32], strides = [1, 1]} : vector<8x128xf32> to vector<8x32xf32>
    %309 = arith.mulf %302, %268 : vector<8x32xf32>
    %310 = arith.mulf %301, %307 : vector<8x32xf32>
    %311 = arith.addf %309, %310 : vector<8x32xf32>
    %312 = math.tanh %311 : vector<8x32xf32>
    %313 = arith.mulf %308, %312 : vector<8x32xf32>
    %314 = vector.extract_strided_slice %5 {offsets = [56, 0], sizes = [8, 128], strides = [1, 1]} : vector<64x128xf32> to vector<8x128xf32>
    %cst_71 = arith.constant dense<0.000000e+00> : vector<8x128xf32>
    %315 = tpu.matmul %291, %6, %cst_71 {dimension_numbers = #tpu.dot_dimension_numbers<[1], [0], [0], [1], [0, 0, 1, 1], [], []>} : vector<8x32xf32>, vector<32x128xf32>, vector<8x128xf32> -> vector<8x128xf32>
    %316 = arith.addf %314, %315 : vector<8x128xf32>
    %317 = arith.negf %316 : vector<8x128xf32>
    %318 = math.exp %317 : vector<8x128xf32>
    %cst_72 = arith.constant 1.000000e+00 : f32
    %319 = vector.broadcast %cst_72 : f32 to vector<8x128xf32>
    %320 = arith.addf %319, %318 : vector<8x128xf32>
    %321 = arith.divf %319, %320 : vector<8x128xf32>
    %322 = vector.extract_strided_slice %321 {offsets = [0, 0], sizes = [8, 32], strides = [1, 1]} : vector<8x128xf32> to vector<8x32xf32>
    %323 = vector.extract_strided_slice %321 {offsets = [0, 32], sizes = [8, 32], strides = [1, 1]} : vector<8x128xf32> to vector<8x32xf32>
    %324 = vector.extract_strided_slice %321 {offsets = [0, 64], sizes = [8, 32], strides = [1, 1]} : vector<8x128xf32> to vector<8x32xf32>
    %cst_73 = arith.constant 2.000000e+00 : f32
    %325 = vector.broadcast %cst_73 : f32 to vector<8x32xf32>
    %326 = arith.mulf %325, %324 : vector<8x32xf32>
    %cst_74 = arith.constant 1.000000e+00 : f32
    %327 = vector.broadcast %cst_74 : f32 to vector<8x32xf32>
    %328 = arith.subf %326, %327 : vector<8x32xf32>
    %329 = vector.extract_strided_slice %321 {offsets = [0, 96], sizes = [8, 32], strides = [1, 1]} : vector<8x128xf32> to vector<8x32xf32>
    %330 = arith.mulf %323, %289 : vector<8x32xf32>
    %331 = arith.mulf %322, %328 : vector<8x32xf32>
    %332 = arith.addf %330, %331 : vector<8x32xf32>
    %333 = math.tanh %332 : vector<8x32xf32>
    %334 = arith.mulf %329, %333 : vector<8x32xf32>
    %335 = tpu.concatenate %313, %334 in 1 : vector<8x32xf32>, vector<8x32xf32> -> vector<8x64xf32>
    %cst_75 = arith.constant dense<0.000000e+00> : vector<8x128xf32>
    %336 = tpu.matmul %335, %7, %cst_75 {dimension_numbers = #tpu.dot_dimension_numbers<[1], [0], [0], [1], [0, 0, 1, 1], [], []>} : vector<8x64xf32>, vector<64x128xf32>, vector<8x128xf32> -> vector<8x128xf32>
    %337 = vector.broadcast %8 : vector<1x128xf32> to vector<8x128xf32>
    %338 = arith.addf %336, %337 : vector<8x128xf32>
    %339 = arith.negf %338 : vector<8x128xf32>
    %340 = math.exp %339 : vector<8x128xf32>
    %cst_76 = arith.constant 1.000000e+00 : f32
    %341 = vector.broadcast %cst_76 : f32 to vector<8x128xf32>
    %342 = arith.addf %341, %340 : vector<8x128xf32>
    %343 = arith.divf %341, %342 : vector<8x128xf32>
    %344 = vector.extract_strided_slice %343 {offsets = [0, 0], sizes = [8, 32], strides = [1, 1]} : vector<8x128xf32> to vector<8x32xf32>
    %345 = vector.extract_strided_slice %343 {offsets = [0, 32], sizes = [8, 32], strides = [1, 1]} : vector<8x128xf32> to vector<8x32xf32>
    %346 = vector.extract_strided_slice %343 {offsets = [0, 64], sizes = [8, 32], strides = [1, 1]} : vector<8x128xf32> to vector<8x32xf32>
    %cst_77 = arith.constant 2.000000e+00 : f32
    %347 = vector.broadcast %cst_77 : f32 to vector<8x32xf32>
    %348 = arith.mulf %347, %346 : vector<8x32xf32>
    %cst_78 = arith.constant 1.000000e+00 : f32
    %349 = vector.broadcast %cst_78 : f32 to vector<8x32xf32>
    %350 = arith.subf %348, %349 : vector<8x32xf32>
    %351 = vector.extract_strided_slice %343 {offsets = [0, 96], sizes = [8, 32], strides = [1, 1]} : vector<8x128xf32> to vector<8x32xf32>
    %352 = arith.mulf %345, %311 : vector<8x32xf32>
    %353 = arith.mulf %344, %350 : vector<8x32xf32>
    %354 = arith.addf %352, %353 : vector<8x32xf32>
    %355 = math.tanh %354 : vector<8x32xf32>
    %356 = arith.mulf %351, %355 : vector<8x32xf32>
    %c0_79 = arith.constant 0 : index
    %c0_80 = arith.constant 0 : index
    %357 = vector.load %arg7[%c0_79, %c0_80] : memref<1x32xf32, #tpu.memory_space<vmem>>, vector<1x32xf32>
    %358 = vector.broadcast %357 : vector<1x32xf32> to vector<8x32xf32>
    %359 = arith.mulf %356, %358 : vector<8x32xf32>
    %cst_81 = arith.constant dense<0.000000e+00> : vector<8xf32>
    %360 = vector.multi_reduction <add>, %359, %cst_81 [1] : vector<8x32xf32> to vector<8xf32>
    %361 = vector.shape_cast %360 : vector<8xf32> to vector<8x1xf32>
    %c0_82 = arith.constant 0 : index
    %c0_83 = arith.constant 0 : index
    %362 = vector.load %arg8[%c0_82, %c0_83] : memref<1x1xf32, #tpu.memory_space<vmem>>, vector<1x1xf32>
    %363 = vector.broadcast %362 : vector<1x1xf32> to vector<8x1xf32>
    %364 = arith.addf %361, %363 : vector<8x1xf32>
    %c0_84 = arith.constant 0 : index
    %c0_85 = arith.constant 0 : index
    %365 = vector.load %arg9[%c0_84, %c0_85] : memref<8x1xf32, #tpu.memory_space<vmem>>, vector<8x1xf32>
    tpu.vector_store %arg9[%c0_84, %c0_85], %364 {strides = array<i32>} : memref<8x1xf32, #tpu.memory_space<vmem>>, vector<8x1xf32>,
    return
  }
  func.func @transform_0(%arg0: i32) -> (i32, i32) {
    %c0_i32 = arith.constant 0 : i32
    %c0_i32_0 = arith.constant 0 : i32
    %c0_i32_1 = arith.constant 0 : i32
    return %c0_i32, %c0_i32_0 : i32, i32
  }
  func.func @transform_1(%arg0: i32) -> (i32, i32) {
    %c0_i32 = arith.constant 0 : i32
    %c0_i32_0 = arith.constant 0 : i32
    %c0_i32_1 = arith.constant 0 : i32
    return %c0_i32, %c0_i32_0 : i32, i32
  }
  func.func @transform_2(%arg0: i32) -> (i32, i32) {
    %c0_i32 = arith.constant 0 : i32
    %c0_i32_0 = arith.constant 0 : i32
    %c0_i32_1 = arith.constant 0 : i32
    return %c0_i32, %c0_i32_0 : i32, i32
  }
  func.func @transform_3(%arg0: i32) -> (i32, i32) {
    %c0_i32 = arith.constant 0 : i32
    %c0_i32_0 = arith.constant 0 : i32
    %c0_i32_1 = arith.constant 0 : i32
    return %c0_i32, %c0_i32_0 : i32, i32
  }
  func.func @transform_4(%arg0: i32) -> (i32, i32) {
    %c0_i32 = arith.constant 0 : i32
    %c0_i32_0 = arith.constant 0 : i32
    %c0_i32_1 = arith.constant 0 : i32
    return %c0_i32, %c0_i32_0 : i32, i32
  }
  func.func @transform_5(%arg0: i32) -> (i32, i32) {
    %c0_i32 = arith.constant 0 : i32
    %c0_i32_0 = arith.constant 0 : i32
    %c0_i32_1 = arith.constant 0 : i32
    return %c0_i32, %c0_i32_0 : i32, i32
  }
  func.func @transform_6(%arg0: i32) -> (i32, i32) {
    %c0_i32 = arith.constant 0 : i32
    %c0_i32_0 = arith.constant 0 : i32
    %c0_i32_1 = arith.constant 0 : i32
    return %c0_i32, %c0_i32_0 : i32, i32
  }
  func.func @transform_7(%arg0: i32) -> (i32, i32) {
    %c0_i32 = arith.constant 0 : i32
    %c0_i32_0 = arith.constant 0 : i32
    %c0_i32_1 = arith.constant 0 : i32
    return %c0_i32, %c0_i32_0 : i32, i32
  }
  func.func @transform_8(%arg0: i32) -> (i32, i32) {
    %c0_i32 = arith.constant 0 : i32
    %c0_i32_0 = arith.constant 0 : i32
    %c0_i32_1 = arith.constant 0 : i32
    return %c0_i32, %c0_i32_0 : i32, i32
  }
}

</mosaic_0001>

<llo_original>
// kernel: lstm_forward.1
$region0: #{lstm_forward.1}
  #allocation0 [shape = 'u32[]', space=smem, size = 0x4, offset = 0x4, fixed_abs, tag = 'smem constant byte address 0x4 - core index']
  #allocation1 [shape = 'u32[72,128]{1,0:T(1,128)}', space=vmem, size = 0x9000, scoped, tag = 'internal scratch']
  #allocation2 [shape = 'f32[1,1]{1,0:T(1,128)S(1)}', space=vmem, size = 0x200, scoped, tag = 'scoped memory for lstm_forward.1']
  %s0 = inlined_call_operand.vmem [shape: f32[64,4], index: 0, kind: input, shape index: {}]
  %s1 = inlined_call_operand.vmem [shape: f32[4,128], index: 1, kind: input, shape index: {}]
  %s2 = inlined_call_operand.vmem [shape: f32[32,128], index: 2, kind: input, shape index: {}]
  %s3 = inlined_call_operand.vmem [shape: f32[1,128], index: 3, kind: input, shape index: {}]
  %s4 = inlined_call_operand.vmem [shape: f32[64,128], index: 4, kind: input, shape index: {}]
  %s5 = inlined_call_operand.vmem [shape: f32[1,128], index: 5, kind: input, shape index: {}]
  %s6 = inlined_call_operand.vmem [shape: f32[1,32], index: 6, kind: input, shape index: {}]
  %s7 = inlined_call_operand.<no memory space> [shape: f32[1,1], index: 7, kind: input, shape index: {}]
  %s8 = inlined_call_operand.vmem [shape: f32[8,1], index: 8, kind: output, shape index: {}]
  %s9 = sld [smem:[#allocation0]]
  $region42: #{lstm_forward.1} parent=0
    _
  %s11 = ssub.s32 1, %s9
  %s12 = scalar_select 0, %s11, %s9
  %v13 = vstv %s7
  %14 = vst [vmem:[#allocation2] sm:$0x1] %v13
  // Predicated region
  $region2: #{lstm_forward.1} parent=0 // pred_check
    _
  $region3: #{lstm_forward.1} parent=0 // pred_check_branch
    %16 = sbr.rel (0) target = $region5
  $region4: #{lstm_forward.1} parent=0 // pred_region
    _
  $region5: #{lstm_forward.1} parent=0 // pred_fallthru
    _
  // Predicated region
  $region6: #{lstm_forward.1} parent=0 // pred_check
    _
  $region7: #{lstm_forward.1} parent=0 // pred_check_branch
    %18 = sbr.rel (0) target = $region9
  $region8: #{lstm_forward.1} parent=0 // pred_region
    _
  $region9: #{lstm_forward.1} parent=0 // pred_fallthru
    _
  // Predicated region
  $region10: #{lstm_forward.1} parent=0 // pred_check
    _
  $region11: #{lstm_forward.1} parent=0 // pred_check_branch
    %20 = sbr.rel (0) target = $region13
  $region12: #{lstm_forward.1} parent=0 // pred_region
    _
  $region13: #{lstm_forward.1} parent=0 // pred_fallthru
    _
  // Predicated region
  $region14: #{lstm_forward.1} parent=0 // pred_check
    _
  $region15: #{lstm_forward.1} parent=0 // pred_check_branch
    %22 = sbr.rel (0) target = $region17
  $region16: #{lstm_forward.1} parent=0 // pred_region
    _
  $region17: #{lstm_forward.1} parent=0 // pred_fallthru
    _
  // Predicated region
  $region18: #{lstm_forward.1} parent=0 // pred_check
    _
  $region19: #{lstm_forward.1} parent=0 // pred_check_branch
    %24 = sbr.rel (0) target = $region21
  $region20: #{lstm_forward.1} parent=0 // pred_region
    _
  $region21: #{lstm_forward.1} parent=0 // pred_fallthru
    _
  // Predicated region
  $region22: #{lstm_forward.1} parent=0 // pred_check
    _
  $region23: #{lstm_forward.1} parent=0 // pred_check_branch
    %26 = sbr.rel (0) target = $region25
  $region24: #{lstm_forward.1} parent=0 // pred_region
    _
  $region25: #{lstm_forward.1} parent=0 // pred_fallthru
    _
  // Predicated region
  $region26: #{lstm_forward.1} parent=0 // pred_check
    _
  $region27: #{lstm_forward.1} parent=0 // pred_check_branch
    %28 = sbr.rel (0) target = $region29
  $region28: #{lstm_forward.1} parent=0 // pred_region
    _
  $region29: #{lstm_forward.1} parent=0 // pred_fallthru
    _
  // Predicated region
  $region30: #{lstm_forward.1} parent=0 // pred_check
    _
  $region31: #{lstm_forward.1} parent=0 // pred_check_branch
    %30 = sbr.rel (0) target = $region33
  $region32: #{lstm_forward.1} parent=0 // pred_region
    _
  $region33: #{lstm_forward.1} parent=0 // pred_fallthru
    _
  %v31 = vld [vmem:[%s0] sm:$0xff]
  %v32 = vld [vmem:[%s0 + $0x8] sm:$0xff]
  %v33 = vld [vmem:[%s0 + $0x10] sm:$0xff]
  %v34 = vld [vmem:[%s0 + $0x18] sm:$0xff]
  %v35 = vld [vmem:[%s0 + $0x20] sm:$0xff]
  %v36 = vld [vmem:[%s0 + $0x28] sm:$0xff]
  %v37 = vld [vmem:[%s0 + $0x30] sm:$0xff]
  %v38 = vld [vmem:[%s0 + $0x38] sm:$0xff]
  %v39 = vld [vmem:[%s1] sm:$0xf]
  %v40 = vld [vmem:[%s3] sm:$0x1]
  %v42 = vperm.slane %v40, 0
  %vm44 = vcmask 31744
  %v46 = vsel %vm44, %v31, 0
  %v49 = vsel %vm44, %v32, 0
  %v52 = vsel %vm44, %v33, 0
  %v55 = vsel %vm44, %v34, 0
  %v58 = vsel %vm44, %v35, 0
  %v61 = vsel %vm44, %v36, 0
  %v64 = vsel %vm44, %v37, 0
  %v67 = vsel %vm44, %v38, 0
  %vm69 = vcmask 1043456
  %v71 = vsel %vm69, %v39, 0
  %73 = vmatpush.msra.mxu0 0.0
  %74 = vmatpush.msra.mxu0 0.0
  %75 = vmatpush.msra.mxu0 0.0
  %76 = vmatpush.msra.mxu0 0.0
  %77 = vmatpush.msra.mxu0 0.0
  %78 = vmatpush.msra.mxu0 0.0
  %79 = vmatpush.msra.mxu0 0.0
  %80 = vmatpush.msra.mxu0 0.0
  %81 = vmatpush.msra.mxu0 0.0
  %82 = vmatpush.msra.mxu0 0.0
  %83 = vmatpush.msra.mxu0 0.0
  %84 = vmatpush.msra.mxu0 0.0
  %85 = vmatpush.msra.mxu0 0.0
  %86 = vmatpush.msra.mxu0 0.0
  %87 = vmatpush.msra.mxu0 0.0
  %88 = vmatpush.msra.mxu0 %v71
  %89 = vmatmul.f32.gmra.mxu0 %v46
  %v90 = vpop.f32.mrf.mxu0
  %v91 = vadd.f32 %v42, %v90
  %92 = vmatmul.f32.gmra.mxu0 %v49
  %v93 = vpop.f32.mrf.mxu0
  %v94 = vadd.f32 %v42, %v93
  %95 = vmatmul.f32.gmra.mxu0 %v52
  %v96 = vpop.f32.mrf.mxu0
  %v97 = vadd.f32 %v42, %v96
  %98 = vmatmul.f32.gmra.mxu0 %v55
  %v99 = vpop.f32.mrf.mxu0
  %v100 = vadd.f32 %v42, %v99
  %101 = vmatmul.f32.gmra.mxu0 %v58
  %v102 = vpop.f32.mrf.mxu0
  %v103 = vadd.f32 %v42, %v102
  %104 = vmatmul.f32.gmra.mxu0 %v61
  %v105 = vpop.f32.mrf.mxu0
  %v106 = vadd.f32 %v42, %v105
  %107 = vmatmul.f32.gmra.mxu0 %v64
  %v108 = vpop.f32.mrf.mxu0
  %v109 = vadd.f32 %v42, %v108
  %110 = vmatmul.f32.gmra.mxu0 %v67
  %v111 = vpop.f32.mrf.mxu0
  %v112 = vadd.f32 %v42, %v111
  %113 = vdwg.mxu0
  %v114 = vld [vmem:[%s2] sm:$0xff]
  %v115 = vld [vmem:[%s2 + $0x8] sm:$0xff]
  %v116 = vld [vmem:[%s2 + $0x10] sm:$0xff]
  %v117 = vld [vmem:[%s2 + $0x18] sm:$0xff]
  %v118 = vld [vmem:[%s4] sm:$0xff]
  %v119 = vld [vmem:[%s4 + $0x8] sm:$0xff]
  %v120 = vld [vmem:[%s4 + $0x10] sm:$0xff]
  %v121 = vld [vmem:[%s4 + $0x18] sm:$0xff]
  %v122 = vld [vmem:[%s4 + $0x20] sm:$0xff]
  %v123 = vld [vmem:[%s4 + $0x28] sm:$0xff]
  %v124 = vld [vmem:[%s4 + $0x30] sm:$0xff]
  %v125 = vld [vmem:[%s4 + $0x38] sm:$0xff]
  %v126 = vld [vmem:[%s5] sm:$0x1]
  %vm127 = vcmask 261120
  %v129 = vsel %vm127, 0.0, 0
  %131 = vmatpush.msra.mxu0 0.0
  %132 = vmatpush.msra.mxu0 0.0
  %133 = vmatpush.msra.mxu0 0.0
  %134 = vmatpush.msra.mxu0 0.0
  %135 = vmatpush.msra.mxu0 0.0
  %136 = vmatpush.msra.mxu0 0.0
  %137 = vmatpush.msra.mxu0 0.0
  %138 = vmatpush.msra.mxu0 0.0
  %139 = vmatpush.msra.mxu0 0.0
  %140 = vmatpush.msra.mxu0 0.0
  %141 = vmatpush.msra.mxu0 0.0
  %142 = vmatpush.msra.mxu0 0.0
  %143 = vmatpush.msra.mxu0 %v117
  %144 = vmatpush.msra.mxu0 %v116
  %145 = vmatpush.msra.mxu0 %v115
  %146 = vmatpush.msra.mxu0 %v114
  %147 = vmatmul.f32.gmra.mxu0 %v129
  %v148 = vpop.f32.mrf.mxu0
  %v149 = vadd.f32 0.0, %v148
  %150 = vdwg.mxu0
  %v151 = vadd.f32 %v91, %v149
  %v152 = vxor.u32 %v151, 2147483648
  %v153 = vmul.f32 %v152, 1.442695
  %v154 = vpow.pop %v153
  %v155 = vadd.f32 %v154, 1.0
  %v156 = vrcp.pop %v155
  %v157 = vmul.f32 %v155, %v156
  %v158 = vsub.f32 1.0, %v157
  %v159 = vmul.f32 %v156, %v158
  %v160 = vadd.f32 %v156, %v159
  %vm161 = vweird.f32 %v155
  %vm162 = vweird.f32 %v156
  %vm163 = vmor %vm161, %vm162
  %v164 = vsel %vm163, %v156, %v160
  %v165 = vand.u32 2147483647, %v155
  %vm166 = vcmp.eq.f32.partialorder %v165, 8.507059e+37
  %v167 = vand.u32 %v155, 2147483648
  %v168 = vor.u32 1.1754944e-38, %v167
  %v169 = vsel %vm166, %v168, %v164
  %v170 = vmul.f32 1.0, %v169
  %v171 = vmul.f32 %v170, 2.0
  %v172 = vsub.f32 %v171, 1.0
  %v173 = vmul.f32 %v170, 0.0
  %175 = vrot.lane.b32.xlu0 %v172, 64
  %v176 = vpop.permute.xlu0 %175
  %v178 = vmul.f32 %v170, %v176
  %180 = vrot.lane.b32.xlu0 %v178, 32
  %v181 = vpop.permute.xlu0 %180
  %v183 = vadd.f32 %v173, %v181
  %v184 = vtanh.pop %v183
  %186 = vrot.lane.b32.xlu0 %v184, 64
  %v187 = vpop.permute.xlu0 %186
  %v189 = vmul.f32 %v170, %v187
  %191 = vrot.lane.b32.xlu0 %v189, 64
  %v192 = vpop.permute.xlu0 %191
  %v194 = vsel %vm127, 0.0, %v192
  %v196 = vperm.slane %v126, 0
  %vm198 = vcmask 523264
  %v200 = vsel %vm198, %v194, 0
  %202 = vmatpush.msra.mxu0 0.0
  %203 = vmatpush.msra.mxu0 0.0
  %204 = vmatpush.msra.mxu0 0.0
  %205 = vmatpush.msra.mxu0 0.0
  %206 = vmatpush.msra.mxu0 0.0
  %207 = vmatpush.msra.mxu0 0.0
  %208 = vmatpush.msra.mxu0 0.0
  %209 = vmatpush.msra.mxu0 0.0
  %210 = vmatpush.msra.mxu0 %v125
  %211 = vmatpush.msra.mxu0 %v124
  %212 = vmatpush.msra.mxu0 %v123
  %213 = vmatpush.msra.mxu0 %v122
  %214 = vmatpush.msra.mxu0 %v121
  %215 = vmatpush.msra.mxu0 %v120
  %216 = vmatpush.msra.mxu0 %v119
  %217 = vmatpush.msra.mxu0 %v118
  %218 = vmatmul.f32.gmra.mxu0 %v200
  %v219 = vpop.f32.mrf.mxu0
  %v220 = vadd.f32 %v196, %v219
  %221 = vdwg.mxu0
  %v222 = vxor.u32 %v220, 2147483648
  %v223 = vmul.f32 %v222, 1.442695
  %v224 = vpow.pop %v223
  %v225 = vadd.f32 %v224, 1.0
  %v226 = vrcp.pop %v225
  %v227 = vmul.f32 %v225, %v226
  %v228 = vsub.f32 1.0, %v227
  %v229 = vmul.f32 %v226, %v228
  %v230 = vadd.f32 %v226, %v229
  %vm231 = vweird.f32 %v225
  %vm232 = vweird.f32 %v226
  %vm233 = vmor %vm231, %vm232
  %v234 = vsel %vm233, %v226, %v230
  %v235 = vand.u32 2147483647, %v225
  %vm236 = vcmp.eq.f32.partialorder %v235, 8.507059e+37
  %v237 = vand.u32 %v225, 2147483648
  %v238 = vor.u32 1.1754944e-38, %v237
  %v239 = vsel %vm236, %v238, %v234
  %v240 = vmul.f32 1.0, %v239
  %v241 = vmul.f32 %v240, 2.0
  %v242 = vsub.f32 %v241, 1.0
  %v243 = vmul.f32 %v240, 0.0
  %245 = vrot.lane.b32.xlu0 %v242, 64
  %v246 = vpop.permute.xlu0 %245
  %v248 = vmul.f32 %v240, %v246
  %250 = vrot.lane.b32.xlu0 %v248, 32
  %v251 = vpop.permute.xlu0 %250
  %v253 = vadd.f32 %v243, %v251
  %v254 = vtanh.pop %v253
  %256 = vrot.lane.b32.xlu0 %v254, 64
  %v257 = vpop.permute.xlu0 %256
  %v259 = vmul.f32 %v240, %v257
  %260 = vrot.lane.b32.xlu0 %v189, 32
  %v261 = vpop.permute.xlu0 %260
  %v262 = vsel %vm127, %v261, 0
  %264 = vmatpush.msra.mxu0 0.0
  %265 = vmatpush.msra.mxu0 0.0
  %266 = vmatpush.msra.mxu0 0.0
  %267 = vmatpush.msra.mxu0 0.0
  %268 = vmatpush.msra.mxu0 0.0
  %269 = vmatpush.msra.mxu0 0.0
  %270 = vmatpush.msra.mxu0 0.0
  %271 = vmatpush.msra.mxu0 0.0
  %272 = vmatpush.msra.mxu0 0.0
  %273 = vmatpush.msra.mxu0 0.0
  %274 = vmatpush.msra.mxu0 0.0
  %275 = vmatpush.msra.mxu0 0.0
  %276 = vmatpush.msra.mxu0 %v117
  %277 = vmatpush.msra.mxu0 %v116
  %278 = vmatpush.msra.mxu0 %v115
  %279 = vmatpush.msra.mxu0 %v114
  %280 = vmatmul.f32.gmra.mxu0 %v262
  %v281 = vpop.f32.mrf.mxu0
  %v282 = vadd.f32 0.0, %v281
  %283 = vdwg.mxu0
  %v284 = vadd.f32 %v94, %v282
  %v285 = vxor.u32 %v284, 2147483648
  %v286 = vmul.f32 %v285, 1.442695
  %v287 = vpow.pop %v286
  %v288 = vadd.f32 %v287, 1.0
  %v289 = vrcp.pop %v288
  %v290 = vmul.f32 %v288, %v289
  %v291 = vsub.f32 1.0, %v290
  %v292 = vmul.f32 %v289, %v291
  %v293 = vadd.f32 %v289, %v292
  %vm294 = vweird.f32 %v288
  %vm295 = vweird.f32 %v289
  %vm296 = vmor %vm294, %vm295
  %v297 = vsel %vm296, %v289, %v293
  %v298 = vand.u32 2147483647, %v288
  %vm299 = vcmp.eq.f32.partialorder %v298, 8.507059e+37
  %v300 = vand.u32 %v288, 2147483648
  %v301 = vor.u32 1.1754944e-38, %v300
  %v302 = vsel %vm299, %v301, %v297
  %v303 = vmul.f32 1.0, %v302
  %v304 = vmul.f32 %v303, 2.0
  %v305 = vsub.f32 %v304, 1.0
  %v306 = vmul.f32 %v303, %v183
  %308 = vrot.lane.b32.xlu0 %v305, 64
  %v309 = vpop.permute.xlu0 %308
  %v311 = vmul.f32 %v303, %v309
  %313 = vrot.lane.b32.xlu0 %v311, 32
  %v314 = vpop.permute.xlu0 %313
  %v316 = vadd.f32 %v306, %v314
  %v317 = vtanh.pop %v316
  %319 = vrot.lane.b32.xlu0 %v317, 64
  %v320 = vpop.permute.xlu0 %319
  %v322 = vmul.f32 %v303, %v320
  %324 = vrot.lane.b32.xlu0 %v259, 32
  %v325 = vpop.permute.xlu0 %324
  %328 = vrot.lane.b32.xlu0 %v322, 64
  %v329 = vpop.permute.xlu0 %328
  %v331 = vsel %vm127, %v325, %v329
  %v333 = vsel %vm198, %v331, 0
  %335 = vmatpush.msra.mxu0 0.0
  %336 = vmatpush.msra.mxu0 0.0
  %337 = vmatpush.msra.mxu0 0.0
  %338 = vmatpush.msra.mxu0 0.0
  %339 = vmatpush.msra.mxu0 0.0
  %340 = vmatpush.msra.mxu0 0.0
  %341 = vmatpush.msra.mxu0 0.0
  %342 = vmatpush.msra.mxu0 0.0
  %343 = vmatpush.msra.mxu0 %v125
  %344 = vmatpush.msra.mxu0 %v124
  %345 = vmatpush.msra.mxu0 %v123
  %346 = vmatpush.msra.mxu0 %v122
  %347 = vmatpush.msra.mxu0 %v121
  %348 = vmatpush.msra.mxu0 %v120
  %349 = vmatpush.msra.mxu0 %v119
  %350 = vmatpush.msra.mxu0 %v118
  %351 = vmatmul.f32.gmra.mxu0 %v333
  %v352 = vpop.f32.mrf.mxu0
  %v353 = vadd.f32 %v196, %v352
  %354 = vdwg.mxu0
  %v355 = vxor.u32 %v353, 2147483648
  %v356 = vmul.f32 %v355, 1.442695
  %v357 = vpow.pop %v356
  %v358 = vadd.f32 %v357, 1.0
  %v359 = vrcp.pop %v358
  %v360 = vmul.f32 %v358, %v359
  %v361 = vsub.f32 1.0, %v360
  %v362 = vmul.f32 %v359, %v361
  %v363 = vadd.f32 %v359, %v362
  %vm364 = vweird.f32 %v358
  %vm365 = vweird.f32 %v359
  %vm366 = vmor %vm364, %vm365
  %v367 = vsel %vm366, %v359, %v363
  %v368 = vand.u32 2147483647, %v358
  %vm369 = vcmp.eq.f32.partialorder %v368, 8.507059e+37
  %v370 = vand.u32 %v358, 2147483648
  %v371 = vor.u32 1.1754944e-38, %v370
  %v372 = vsel %vm369, %v371, %v367
  %v373 = vmul.f32 1.0, %v372
  %v374 = vmul.f32 %v373, 2.0
  %v375 = vsub.f32 %v374, 1.0
  %v376 = vmul.f32 %v373, %v253
  %378 = vrot.lane.b32.xlu0 %v375, 64
  %v379 = vpop.permute.xlu0 %378
  %v381 = vmul.f32 %v373, %v379
  %383 = vrot.lane.b32.xlu0 %v381, 32
  %v384 = vpop.permute.xlu0 %383
  %v386 = vadd.f32 %v376, %v384
  %v387 = vtanh.pop %v386
  %389 = vrot.lane.b32.xlu0 %v387, 64
  %v390 = vpop.permute.xlu0 %389
  %v392 = vmul.f32 %v373, %v390
  %393 = vrot.lane.b32.xlu0 %v322, 32
  %v394 = vpop.permute.xlu0 %393
  %v395 = vsel %vm127, %v394, 0
  %397 = vmatpush.msra.mxu0 0.0
  %398 = vmatpush.msra.mxu0 0.0
  %399 = vmatpush.msra.mxu0 0.0
  %400 = vmatpush.msra.mxu0 0.0
  %401 = vmatpush.msra.mxu0 0.0
  %402 = vmatpush.msra.mxu0 0.0
  %403 = vmatpush.msra.mxu0 0.0
  %404 = vmatpush.msra.mxu0 0.0
  %405 = vmatpush.msra.mxu0 0.0
  %406 = vmatpush.msra.mxu0 0.0
  %407 = vmatpush.msra.mxu0 0.0
  %408 = vmatpush.msra.mxu0 0.0
  %409 = vmatpush.msra.mxu0 %v117
  %410 = vmatpush.msra.mxu0 %v116
  %411 = vmatpush.msra.mxu0 %v115
  %412 = vmatpush.msra.mxu0 %v114
  %413 = vmatmul.f32.gmra.mxu0 %v395
  %v414 = vpop.f32.mrf.mxu0
  %v415 = vadd.f32 0.0, %v414
  %416 = vdwg.mxu0
  %v417 = vadd.f32 %v97, %v415
  %v418 = vxor.u32 %v417, 2147483648
  %v419 = vmul.f32 %v418, 1.442695
  %v420 = vpow.pop %v419
  %v421 = vadd.f32 %v420, 1.0
  %v422 = vrcp.pop %v421
  %v423 = vmul.f32 %v421, %v422
  %v424 = vsub.f32 1.0, %v423
  %v425 = vmul.f32 %v422, %v424
  %v426 = vadd.f32 %v422, %v425
  %vm427 = vweird.f32 %v421
  %vm428 = vweird.f32 %v422
  %vm429 = vmor %vm427, %vm428
  %v430 = vsel %vm429, %v422, %v426
  %v431 = vand.u32 2147483647, %v421
  %vm432 = vcmp.eq.f32.partialorder %v431, 8.507059e+37
  %v433 = vand.u32 %v421, 2147483648
  %v434 = vor.u32 1.1754944e-38, %v433
  %v435 = vsel %vm432, %v434, %v430
  %v436 = vmul.f32 1.0, %v435
  %v437 = vmul.f32 %v436, 2.0
  %v438 = vsub.f32 %v437, 1.0
  %v439 = vmul.f32 %v436, %v316
  %441 = vrot.lane.b32.xlu0 %v438, 64
  %v442 = vpop.permute.xlu0 %441
  %v444 = vmul.f32 %v436, %v442
  %446 = vrot.lane.b32.xlu0 %v444, 32
  %v447 = vpop.permute.xlu0 %446
  %v449 = vadd.f32 %v439, %v447
  %v450 = vtanh.pop %v449
  %452 = vrot.lane.b32.xlu0 %v450, 64
  %v453 = vpop.permute.xlu0 %452
  %v455 = vmul.f32 %v436, %v453
  %457 = vrot.lane.b32.xlu0 %v392, 32
  %v458 = vpop.permute.xlu0 %457
  %461 = vrot.lane.b32.xlu0 %v455, 64
  %v462 = vpop.permute.xlu0 %461
  %v464 = vsel %vm127, %v458, %v462
  %v466 = vsel %vm198, %v464, 0
  %468 = vmatpush.msra.mxu0 0.0
  %469 = vmatpush.msra.mxu0 0.0
  %470 = vmatpush.msra.mxu0 0.0
  %471 = vmatpush.msra.mxu0 0.0
  %472 = vmatpush.msra.mxu0 0.0
  %473 = vmatpush.msra.mxu0 0.0
  %474 = vmatpush.msra.mxu0 0.0
  %475 = vmatpush.msra.mxu0 0.0
  %476 = vmatpush.msra.mxu0 %v125
  %477 = vmatpush.msra.mxu0 %v124
  %478 = vmatpush.msra.mxu0 %v123
  %479 = vmatpush.msra.mxu0 %v122
  %480 = vmatpush.msra.mxu0 %v121
  %481 = vmatpush.msra.mxu0 %v120
  %482 = vmatpush.msra.mxu0 %v119
  %483 = vmatpush.msra.mxu0 %v118
  %484 = vmatmul.f32.gmra.mxu0 %v466
  %v485 = vpop.f32.mrf.mxu0
  %v486 = vadd.f32 %v196, %v485
  %487 = vdwg.mxu0
  %v488 = vxor.u32 %v486, 2147483648
  %v489 = vmul.f32 %v488, 1.442695
  %v490 = vpow.pop %v489
  %v491 = vadd.f32 %v490, 1.0
  %v492 = vrcp.pop %v491
  %v493 = vmul.f32 %v491, %v492
  %v494 = vsub.f32 1.0, %v493
  %v495 = vmul.f32 %v492, %v494
  %v496 = vadd.f32 %v492, %v495
  %vm497 = vweird.f32 %v491
  %vm498 = vweird.f32 %v492
  %vm499 = vmor %vm497, %vm498
  %v500 = vsel %vm499, %v492, %v496
  %v501 = vand.u32 2147483647, %v491
  %vm502 = vcmp.eq.f32.partialorder %v501, 8.507059e+37
  %v503 = vand.u32 %v491, 2147483648
  %v504 = vor.u32 1.1754944e-38, %v503
  %v505 = vsel %vm502, %v504, %v500
  %v506 = vmul.f32 1.0, %v505
  %v507 = vmul.f32 %v506, 2.0
  %v508 = vsub.f32 %v507, 1.0
  %v509 = vmul.f32 %v506, %v386
  %511 = vrot.lane.b32.xlu0 %v508, 64
  %v512 = vpop.permute.xlu0 %511
  %v514 = vmul.f32 %v506, %v512
  %516 = vrot.lane.b32.xlu0 %v514, 32
  %v517 = vpop.permute.xlu0 %516
  %v519 = vadd.f32 %v509, %v517
  %v520 = vtanh.pop %v519
  %522 = vrot.lane.b32.xlu0 %v520, 64
  %v523 = vpop.permute.xlu0 %522
  %v525 = vmul.f32 %v506, %v523
  %526 = vrot.lane.b32.xlu0 %v455, 32
  %v527 = vpop.permute.xlu0 %526
  %v528 = vsel %vm127, %v527, 0
  %530 = vmatpush.msra.mxu0 0.0
  %531 = vmatpush.msra.mxu0 0.0
  %532 = vmatpush.msra.mxu0 0.0
  %533 = vmatpush.msra.mxu0 0.0
  %534 = vmatpush.msra.mxu0 0.0
  %535 = vmatpush.msra.mxu0 0.0
  %536 = vmatpush.msra.mxu0 0.0
  %537 = vmatpush.msra.mxu0 0.0
  %538 = vmatpush.msra.mxu0 0.0
  %539 = vmatpush.msra.mxu0 0.0
  %540 = vmatpush.msra.mxu0 0.0
  %541 = vmatpush.msra.mxu0 0.0
  %542 = vmatpush.msra.mxu0 %v117
  %543 = vmatpush.msra.mxu0 %v116
  %544 = vmatpush.msra.mxu0 %v115
  %545 = vmatpush.msra.mxu0 %v114
  %546 = vmatmul.f32.gmra.mxu0 %v528
  %v547 = vpop.f32.mrf.mxu0
  %v548 = vadd.f32 0.0, %v547
  %549 = vdwg.mxu0
  %v550 = vadd.f32 %v100, %v548
  %v551 = vxor.u32 %v550, 2147483648
  %v552 = vmul.f32 %v551, 1.442695
  %v553 = vpow.pop %v552
  %v554 = vadd.f32 %v553, 1.0
  %v555 = vrcp.pop %v554
  %v556 = vmul.f32 %v554, %v555
  %v557 = vsub.f32 1.0, %v556
  %v558 = vmul.f32 %v555, %v557
  %v559 = vadd.f32 %v555, %v558
  %vm560 = vweird.f32 %v554
  %vm561 = vweird.f32 %v555
  %vm562 = vmor %vm560, %vm561
  %v563 = vsel %vm562, %v555, %v559
  %v564 = vand.u32 2147483647, %v554
  %vm565 = vcmp.eq.f32.partialorder %v564, 8.507059e+37
  %v566 = vand.u32 %v554, 2147483648
  %v567 = vor.u32 1.1754944e-38, %v566
  %v568 = vsel %vm565, %v567, %v563
  %v569 = vmul.f32 1.0, %v568
  %v570 = vmul.f32 %v569, 2.0
  %v571 = vsub.f32 %v570, 1.0
  %v572 = vmul.f32 %v569, %v449
  %574 = vrot.lane.b32.xlu0 %v571, 64
  %v575 = vpop.permute.xlu0 %574
  %v577 = vmul.f32 %v569, %v575
  %579 = vrot.lane.b32.xlu0 %v577, 32
  %v580 = vpop.permute.xlu0 %579
  %v582 = vadd.f32 %v572, %v580
  %v583 = vtanh.pop %v582
  %585 = vrot.lane.b32.xlu0 %v583, 64
  %v586 = vpop.permute.xlu0 %585
  %v588 = vmul.f32 %v569, %v586
  %590 = vrot.lane.b32.xlu0 %v525, 32
  %v591 = vpop.permute.xlu0 %590
  %594 = vrot.lane.b32.xlu0 %v588, 64
  %v595 = vpop.permute.xlu0 %594
  %v597 = vsel %vm127, %v591, %v595
  %v599 = vsel %vm198, %v597, 0
  %601 = vmatpush.msra.mxu0 0.0
  %602 = vmatpush.msra.mxu0 0.0
  %603 = vmatpush.msra.mxu0 0.0
  %604 = vmatpush.msra.mxu0 0.0
  %605 = vmatpush.msra.mxu0 0.0
  %606 = vmatpush.msra.mxu0 0.0
  %607 = vmatpush.msra.mxu0 0.0
  %608 = vmatpush.msra.mxu0 0.0
  %609 = vmatpush.msra.mxu0 %v125
  %610 = vmatpush.msra.mxu0 %v124
  %611 = vmatpush.msra.mxu0 %v123
  %612 = vmatpush.msra.mxu0 %v122
  %613 = vmatpush.msra.mxu0 %v121
  %614 = vmatpush.msra.mxu0 %v120
  %615 = vmatpush.msra.mxu0 %v119
  %616 = vmatpush.msra.mxu0 %v118
  %617 = vmatmul.f32.gmra.mxu0 %v599
  %v618 = vpop.f32.mrf.mxu0
  %v619 = vadd.f32 %v196, %v618
  %620 = vdwg.mxu0
  %v621 = vxor.u32 %v619, 2147483648
  %v622 = vmul.f32 %v621, 1.442695
  %v623 = vpow.pop %v622
  %v624 = vadd.f32 %v623, 1.0
  %v625 = vrcp.pop %v624
  %v626 = vmul.f32 %v624, %v625
  %v627 = vsub.f32 1.0, %v626
  %v628 = vmul.f32 %v625, %v627
  %v629 = vadd.f32 %v625, %v628
  %vm630 = vweird.f32 %v624
  %vm631 = vweird.f32 %v625
  %vm632 = vmor %vm630, %vm631
  %v633 = vsel %vm632, %v625, %v629
  %v634 = vand.u32 2147483647, %v624
  %vm635 = vcmp.eq.f32.partialorder %v634, 8.507059e+37
  %v636 = vand.u32 %v624, 2147483648
  %v637 = vor.u32 1.1754944e-38, %v636
  %v638 = vsel %vm635, %v637, %v633
  %v639 = vmul.f32 1.0, %v638
  %v640 = vmul.f32 %v639, 2.0
  %v641 = vsub.f32 %v640, 1.0
  %v642 = vmul.f32 %v639, %v519
  %644 = vrot.lane.b32.xlu0 %v641, 64
  %v645 = vpop.permute.xlu0 %644
  %v647 = vmul.f32 %v639, %v645
  %649 = vrot.lane.b32.xlu0 %v647, 32
  %v650 = vpop.permute.xlu0 %649
  %v652 = vadd.f32 %v642, %v650
  %v653 = vtanh.pop %v652
  %655 = vrot.lane.b32.xlu0 %v653, 64
  %v656 = vpop.permute.xlu0 %655
  %v658 = vmul.f32 %v639, %v656
  %659 = vrot.lane.b32.xlu0 %v588, 32
  %v660 = vpop.permute.xlu0 %659
  %v661 = vsel %vm127, %v660, 0
  %663 = vmatpush.msra.mxu0 0.0
  %664 = vmatpush.msra.mxu0 0.0
  %665 = vmatpush.msra.mxu0 0.0
  %666 = vmatpush.msra.mxu0 0.0
  %667 = vmatpush.msra.mxu0 0.0
  %668 = vmatpush.msra.mxu0 0.0
  %669 = vmatpush.msra.mxu0 0.0
  %670 = vmatpush.msra.mxu0 0.0
  %671 = vmatpush.msra.mxu0 0.0
  %672 = vmatpush.msra.mxu0 0.0
  %673 = vmatpush.msra.mxu0 0.0
  %674 = vmatpush.msra.mxu0 0.0
  %675 = vmatpush.msra.mxu0 %v117
  %676 = vmatpush.msra.mxu0 %v116
  %677 = vmatpush.msra.mxu0 %v115
  %678 = vmatpush.msra.mxu0 %v114
  %679 = vmatmul.f32.gmra.mxu0 %v661
  %v680 = vpop.f32.mrf.mxu0
  %v681 = vadd.f32 0.0, %v680
  %682 = vdwg.mxu0
  %v683 = vadd.f32 %v103, %v681
  %v684 = vxor.u32 %v683, 2147483648
  %v685 = vmul.f32 %v684, 1.442695
  %v686 = vpow.pop %v685
  %v687 = vadd.f32 %v686, 1.0
  %v688 = vrcp.pop %v687
  %v689 = vmul.f32 %v687, %v688
  %v690 = vsub.f32 1.0, %v689
  %v691 = vmul.f32 %v688, %v690
  %v692 = vadd.f32 %v688, %v691
  %vm693 = vweird.f32 %v687
  %vm694 = vweird.f32 %v688
  %vm695 = vmor %vm693, %vm694
  %v696 = vsel %vm695, %v688, %v692
  %v697 = vand.u32 2147483647, %v687
  %vm698 = vcmp.eq.f32.partialorder %v697, 8.507059e+37
  %v699 = vand.u32 %v687, 2147483648
  %v700 = vor.u32 1.1754944e-38, %v699
  %v701 = vsel %vm698, %v700, %v696
  %v702 = vmul.f32 1.0, %v701
  %v703 = vmul.f32 %v702, 2.0
  %v704 = vsub.f32 %v703, 1.0
  %v705 = vmul.f32 %v702, %v582
  %707 = vrot.lane.b32.xlu0 %v704, 64
  %v708 = vpop.permute.xlu0 %707
  %v710 = vmul.f32 %v702, %v708
  %712 = vrot.lane.b32.xlu0 %v710, 32
  %v713 = vpop.permute.xlu0 %712
  %v715 = vadd.f32 %v705, %v713
  %v716 = vtanh.pop %v715
  %718 = vrot.lane.b32.xlu0 %v716, 64
  %v719 = vpop.permute.xlu0 %718
  %v721 = vmul.f32 %v702, %v719
  %723 = vrot.lane.b32.xlu0 %v658, 32
  %v724 = vpop.permute.xlu0 %723
  %727 = vrot.lane.b32.xlu0 %v721, 64
  %v728 = vpop.permute.xlu0 %727
  %v730 = vsel %vm127, %v724, %v728
  %v732 = vsel %vm198, %v730, 0
  %734 = vmatpush.msra.mxu0 0.0
  %735 = vmatpush.msra.mxu0 0.0
  %736 = vmatpush.msra.mxu0 0.0
  %737 = vmatpush.msra.mxu0 0.0
  %738 = vmatpush.msra.mxu0 0.0
  %739 = vmatpush.msra.mxu0 0.0
  %740 = vmatpush.msra.mxu0 0.0
  %741 = vmatpush.msra.mxu0 0.0
  %742 = vmatpush.msra.mxu0 %v125
  %743 = vmatpush.msra.mxu0 %v124
  %744 = vmatpush.msra.mxu0 %v123
  %745 = vmatpush.msra.mxu0 %v122
  %746 = vmatpush.msra.mxu0 %v121
  %747 = vmatpush.msra.mxu0 %v120
  %748 = vmatpush.msra.mxu0 %v119
  %749 = vmatpush.msra.mxu0 %v118
  %750 = vmatmul.f32.gmra.mxu0 %v732
  %v751 = vpop.f32.mrf.mxu0
  %v752 = vadd.f32 %v196, %v751
  %753 = vdwg.mxu0
  %v754 = vxor.u32 %v752, 2147483648
  %v755 = vmul.f32 %v754, 1.442695
  %v756 = vpow.pop %v755
  %v757 = vadd.f32 %v756, 1.0
  %v758 = vrcp.pop %v757
  %v759 = vmul.f32 %v757, %v758
  %v760 = vsub.f32 1.0, %v759
  %v761 = vmul.f32 %v758, %v760
  %v762 = vadd.f32 %v758, %v761
  %vm763 = vweird.f32 %v757
  %vm764 = vweird.f32 %v758
  %vm765 = vmor %vm763, %vm764
  %v766 = vsel %vm765, %v758, %v762
  %v767 = vand.u32 2147483647, %v757
  %vm768 = vcmp.eq.f32.partialorder %v767, 8.507059e+37
  %v769 = vand.u32 %v757, 2147483648
  %v770 = vor.u32 1.1754944e-38, %v769
  %v771 = vsel %vm768, %v770, %v766
  %v772 = vmul.f32 1.0, %v771
  %v773 = vmul.f32 %v772, 2.0
  %v774 = vsub.f32 %v773, 1.0
  %v775 = vmul.f32 %v772, %v652
  %777 = vrot.lane.b32.xlu0 %v774, 64
  %v778 = vpop.permute.xlu0 %777
  %v780 = vmul.f32 %v772, %v778
  %782 = vrot.lane.b32.xlu0 %v780, 32
  %v783 = vpop.permute.xlu0 %782
  %v785 = vadd.f32 %v775, %v783
  %v786 = vtanh.pop %v785
  %788 = vrot.lane.b32.xlu0 %v786, 64
  %v789 = vpop.permute.xlu0 %788
  %v791 = vmul.f32 %v772, %v789
  %792 = vrot.lane.b32.xlu0 %v721, 32
  %v793 = vpop.permute.xlu0 %792
  %v794 = vsel %vm127, %v793, 0
  %796 = vmatpush.msra.mxu0 0.0
  %797 = vmatpush.msra.mxu0 0.0
  %798 = vmatpush.msra.mxu0 0.0
  %799 = vmatpush.msra.mxu0 0.0
  %800 = vmatpush.msra.mxu0 0.0
  %801 = vmatpush.msra.mxu0 0.0
  %802 = vmatpush.msra.mxu0 0.0
  %803 = vmatpush.msra.mxu0 0.0
  %804 = vmatpush.msra.mxu0 0.0
  %805 = vmatpush.msra.mxu0 0.0
  %806 = vmatpush.msra.mxu0 0.0
  %807 = vmatpush.msra.mxu0 0.0
  %808 = vmatpush.msra.mxu0 %v117
  %809 = vmatpush.msra.mxu0 %v116
  %810 = vmatpush.msra.mxu0 %v115
  %811 = vmatpush.msra.mxu0 %v114
  %812 = vmatmul.f32.gmra.mxu0 %v794
  %v813 = vpop.f32.mrf.mxu0
  %v814 = vadd.f32 0.0, %v813
  %815 = vdwg.mxu0
  %v816 = vadd.f32 %v106, %v814
  %v817 = vxor.u32 %v816, 2147483648
  %v818 = vmul.f32 %v817, 1.442695
  %v819 = vpow.pop %v818
  %v820 = vadd.f32 %v819, 1.0
  %v821 = vrcp.pop %v820
  %v822 = vmul.f32 %v820, %v821
  %v823 = vsub.f32 1.0, %v822
  %v824 = vmul.f32 %v821, %v823
  %v825 = vadd.f32 %v821, %v824
  %vm826 = vweird.f32 %v820
  %vm827 = vweird.f32 %v821
  %vm828 = vmor %vm826, %vm827
  %v829 = vsel %vm828, %v821, %v825
  %v830 = vand.u32 2147483647, %v820
  %vm831 = vcmp.eq.f32.partialorder %v830, 8.507059e+37
  %v832 = vand.u32 %v820, 2147483648
  %v833 = vor.u32 1.1754944e-38, %v832
  %v834 = vsel %vm831, %v833, %v829
  %v835 = vmul.f32 1.0, %v834
  %v836 = vmul.f32 %v835, 2.0
  %v837 = vsub.f32 %v836, 1.0
  %v838 = vmul.f32 %v835, %v715
  %840 = vrot.lane.b32.xlu0 %v837, 64
  %v841 = vpop.permute.xlu0 %840
  %v843 = vmul.f32 %v835, %v841
  %845 = vrot.lane.b32.xlu0 %v843, 32
  %v846 = vpop.permute.xlu0 %845
  %v848 = vadd.f32 %v838, %v846
  %v849 = vtanh.pop %v848
  %851 = vrot.lane.b32.xlu0 %v849, 64
  %v852 = vpop.permute.xlu0 %851
  %v854 = vmul.f32 %v835, %v852
  %856 = vrot.lane.b32.xlu0 %v791, 32
  %v857 = vpop.permute.xlu0 %856
  %860 = vrot.lane.b32.xlu0 %v854, 64
  %v861 = vpop.permute.xlu0 %860
  %v863 = vsel %vm127, %v857, %v861
  %v865 = vsel %vm198, %v863, 0
  %867 = vmatpush.msra.mxu0 0.0
  %868 = vmatpush.msra.mxu0 0.0
  %869 = vmatpush.msra.mxu0 0.0
  %870 = vmatpush.msra.mxu0 0.0
  %871 = vmatpush.msra.mxu0 0.0
  %872 = vmatpush.msra.mxu0 0.0
  %873 = vmatpush.msra.mxu0 0.0
  %874 = vmatpush.msra.mxu0 0.0
  %875 = vmatpush.msra.mxu0 %v125
  %876 = vmatpush.msra.mxu0 %v124
  %877 = vmatpush.msra.mxu0 %v123
  %878 = vmatpush.msra.mxu0 %v122
  %879 = vmatpush.msra.mxu0 %v121
  %880 = vmatpush.msra.mxu0 %v120
  %881 = vmatpush.msra.mxu0 %v119
  %882 = vmatpush.msra.mxu0 %v118
  %883 = vmatmul.f32.gmra.mxu0 %v865
  %v884 = vpop.f32.mrf.mxu0
  %v885 = vadd.f32 %v196, %v884
  %886 = vdwg.mxu0
  %v887 = vxor.u32 %v885, 2147483648
  %v888 = vmul.f32 %v887, 1.442695
  %v889 = vpow.pop %v888
  %v890 = vadd.f32 %v889, 1.0
  %v891 = vrcp.pop %v890
  %v892 = vmul.f32 %v890, %v891
  %v893 = vsub.f32 1.0, %v892
  %v894 = vmul.f32 %v891, %v893
  %v895 = vadd.f32 %v891, %v894
  %vm896 = vweird.f32 %v890
  %vm897 = vweird.f32 %v891
  %vm898 = vmor %vm896, %vm897
  %v899 = vsel %vm898, %v891, %v895
  %v900 = vand.u32 2147483647, %v890
  %vm901 = vcmp.eq.f32.partialorder %v900, 8.507059e+37
  %v902 = vand.u32 %v890, 2147483648
  %v903 = vor.u32 1.1754944e-38, %v902
  %v904 = vsel %vm901, %v903, %v899
  %v905 = vmul.f32 1.0, %v904
  %v906 = vmul.f32 %v905, 2.0
  %v907 = vsub.f32 %v906, 1.0
  %v908 = vmul.f32 %v905, %v785
  %910 = vrot.lane.b32.xlu0 %v907, 64
  %v911 = vpop.permute.xlu0 %910
  %v913 = vmul.f32 %v905, %v911
  %915 = vrot.lane.b32.xlu0 %v913, 32
  %v916 = vpop.permute.xlu0 %915
  %v918 = vadd.f32 %v908, %v916
  %v919 = vtanh.pop %v918
  %921 = vrot.lane.b32.xlu0 %v919, 64
  %v922 = vpop.permute.xlu0 %921
  %v924 = vmul.f32 %v905, %v922
  %925 = vrot.lane.b32.xlu0 %v854, 32
  %v926 = vpop.permute.xlu0 %925
  %v927 = vsel %vm127, %v926, 0
  %929 = vmatpush.msra.mxu0 0.0
  %930 = vmatpush.msra.mxu0 0.0
  %931 = vmatpush.msra.mxu0 0.0
  %932 = vmatpush.msra.mxu0 0.0
  %933 = vmatpush.msra.mxu0 0.0
  %934 = vmatpush.msra.mxu0 0.0
  %935 = vmatpush.msra.mxu0 0.0
  %936 = vmatpush.msra.mxu0 0.0
  %937 = vmatpush.msra.mxu0 0.0
  %938 = vmatpush.msra.mxu0 0.0
  %939 = vmatpush.msra.mxu0 0.0
  %940 = vmatpush.msra.mxu0 0.0
  %941 = vmatpush.msra.mxu0 %v117
  %942 = vmatpush.msra.mxu0 %v116
  %943 = vmatpush.msra.mxu0 %v115
  %944 = vmatpush.msra.mxu0 %v114
  %945 = vmatmul.f32.gmra.mxu0 %v927
  %v946 = vpop.f32.mrf.mxu0
  %v947 = vadd.f32 0.0, %v946
  %948 = vdwg.mxu0
  %v949 = vadd.f32 %v109, %v947
  %v950 = vxor.u32 %v949, 2147483648
  %v951 = vmul.f32 %v950, 1.442695
  %v952 = vpow.pop %v951
  %v953 = vadd.f32 %v952, 1.0
  %v954 = vrcp.pop %v953
  %v955 = vmul.f32 %v953, %v954
  %v956 = vsub.f32 1.0, %v955
  %v957 = vmul.f32 %v954, %v956
  %v958 = vadd.f32 %v954, %v957
  %vm959 = vweird.f32 %v953
  %vm960 = vweird.f32 %v954
  %vm961 = vmor %vm959, %vm960
  %v962 = vsel %vm961, %v954, %v958
  %v963 = vand.u32 2147483647, %v953
  %vm964 = vcmp.eq.f32.partialorder %v963, 8.507059e+37
  %v965 = vand.u32 %v953, 2147483648
  %v966 = vor.u32 1.1754944e-38, %v965
  %v967 = vsel %vm964, %v966, %v962
  %v968 = vmul.f32 1.0, %v967
  %v969 = vmul.f32 %v968, 2.0
  %v970 = vsub.f32 %v969, 1.0
  %v971 = vmul.f32 %v968, %v848
  %973 = vrot.lane.b32.xlu0 %v970, 64
  %v974 = vpop.permute.xlu0 %973
  %v976 = vmul.f32 %v968, %v974
  %978 = vrot.lane.b32.xlu0 %v976, 32
  %v979 = vpop.permute.xlu0 %978
  %v981 = vadd.f32 %v971, %v979
  %v982 = vtanh.pop %v981
  %984 = vrot.lane.b32.xlu0 %v982, 64
  %v985 = vpop.permute.xlu0 %984
  %v987 = vmul.f32 %v968, %v985
  %989 = vrot.lane.b32.xlu0 %v924, 32
  %v990 = vpop.permute.xlu0 %989
  %993 = vrot.lane.b32.xlu0 %v987, 64
  %v994 = vpop.permute.xlu0 %993
  %v996 = vsel %vm127, %v990, %v994
  %v998 = vsel %vm198, %v996, 0
  %1000 = vmatpush.msra.mxu0 0.0
  %1001 = vmatpush.msra.mxu0 0.0
  %1002 = vmatpush.msra.mxu0 0.0
  %1003 = vmatpush.msra.mxu0 0.0
  %1004 = vmatpush.msra.mxu0 0.0
  %1005 = vmatpush.msra.mxu0 0.0
  %1006 = vmatpush.msra.mxu0 0.0
  %1007 = vmatpush.msra.mxu0 0.0
  %1008 = vmatpush.msra.mxu0 %v125
  %1009 = vmatpush.msra.mxu0 %v124
  %1010 = vmatpush.msra.mxu0 %v123
  %1011 = vmatpush.msra.mxu0 %v122
  %1012 = vmatpush.msra.mxu0 %v121
  %1013 = vmatpush.msra.mxu0 %v120
  %1014 = vmatpush.msra.mxu0 %v119
  %1015 = vmatpush.msra.mxu0 %v118
  %1016 = vmatmul.f32.gmra.mxu0 %v998
  %v1017 = vpop.f32.mrf.mxu0
  %v1018 = vadd.f32 %v196, %v1017
  %1019 = vdwg.mxu0
  %v1020 = vxor.u32 %v1018, 2147483648
  %v1021 = vmul.f32 %v1020, 1.442695
  %v1022 = vpow.pop %v1021
  %v1023 = vadd.f32 %v1022, 1.0
  %v1024 = vrcp.pop %v1023
  %v1025 = vmul.f32 %v1023, %v1024
  %v1026 = vsub.f32 1.0, %v1025
  %v1027 = vmul.f32 %v1024, %v1026
  %v1028 = vadd.f32 %v1024, %v1027
  %vm1029 = vweird.f32 %v1023
  %vm1030 = vweird.f32 %v1024
  %vm1031 = vmor %vm1029, %vm1030
  %v1032 = vsel %vm1031, %v1024, %v1028
  %v1033 = vand.u32 2147483647, %v1023
  %vm1034 = vcmp.eq.f32.partialorder %v1033, 8.507059e+37
  %v1035 = vand.u32 %v1023, 2147483648
  %v1036 = vor.u32 1.1754944e-38, %v1035
  %v1037 = vsel %vm1034, %v1036, %v1032
  %v1038 = vmul.f32 1.0, %v1037
  %v1039 = vmul.f32 %v1038, 2.0
  %v1040 = vsub.f32 %v1039, 1.0
  %v1041 = vmul.f32 %v1038, %v918
  %1043 = vrot.lane.b32.xlu0 %v1040, 64
  %v1044 = vpop.permute.xlu0 %1043
  %v1046 = vmul.f32 %v1038, %v1044
  %1048 = vrot.lane.b32.xlu0 %v1046, 32
  %v1049 = vpop.permute.xlu0 %1048
  %v1051 = vadd.f32 %v1041, %v1049
  %v1052 = vtanh.pop %v1051
  %1054 = vrot.lane.b32.xlu0 %v1052, 64
  %v1055 = vpop.permute.xlu0 %1054
  %v1057 = vmul.f32 %v1038, %v1055
  %1058 = vrot.lane.b32.xlu0 %v987, 32
  %v1059 = vpop.permute.xlu0 %1058
  %v1060 = vsel %vm127, %v1059, 0
  %1062 = vmatpush.msra.mxu0 0.0
  %1063 = vmatpush.msra.mxu0 0.0
  %1064 = vmatpush.msra.mxu0 0.0
  %1065 = vmatpush.msra.mxu0 0.0
  %1066 = vmatpush.msra.mxu0 0.0
  %1067 = vmatpush.msra.mxu0 0.0
  %1068 = vmatpush.msra.mxu0 0.0
  %1069 = vmatpush.msra.mxu0 0.0
  %1070 = vmatpush.msra.mxu0 0.0
  %1071 = vmatpush.msra.mxu0 0.0
  %1072 = vmatpush.msra.mxu0 0.0
  %1073 = vmatpush.msra.mxu0 0.0
  %1074 = vmatpush.msra.mxu0 %v117
  %1075 = vmatpush.msra.mxu0 %v116
  %1076 = vmatpush.msra.mxu0 %v115
  %1077 = vmatpush.msra.mxu0 %v114
  %1078 = vmatmul.f32.gmra.mxu0 %v1060
  %v1079 = vpop.f32.mrf.mxu0
  %v1080 = vadd.f32 0.0, %v1079
  %1081 = vdwg.mxu0
  %v1082 = vadd.f32 %v112, %v1080
  %v1083 = vxor.u32 %v1082, 2147483648
  %v1084 = vmul.f32 %v1083, 1.442695
  %v1085 = vpow.pop %v1084
  %v1086 = vadd.f32 %v1085, 1.0
  %v1087 = vrcp.pop %v1086
  %v1088 = vmul.f32 %v1086, %v1087
  %v1089 = vsub.f32 1.0, %v1088
  %v1090 = vmul.f32 %v1087, %v1089
  %v1091 = vadd.f32 %v1087, %v1090
  %vm1092 = vweird.f32 %v1086
  %vm1093 = vweird.f32 %v1087
  %vm1094 = vmor %vm1092, %vm1093
  %v1095 = vsel %vm1094, %v1087, %v1091
  %v1096 = vand.u32 2147483647, %v1086
  %vm1097 = vcmp.eq.f32.partialorder %v1096, 8.507059e+37
  %v1098 = vand.u32 %v1086, 2147483648
  %v1099 = vor.u32 1.1754944e-38, %v1098
  %v1100 = vsel %vm1097, %v1099, %v1095
  %v1101 = vmul.f32 1.0, %v1100
  %v1102 = vmul.f32 %v1101, 2.0
  %v1103 = vsub.f32 %v1102, 1.0
  %v1104 = vmul.f32 %v1101, %v981
  %1106 = vrot.lane.b32.xlu0 %v1103, 64
  %v1107 = vpop.permute.xlu0 %1106
  %v1109 = vmul.f32 %v1101, %v1107
  %1111 = vrot.lane.b32.xlu0 %v1109, 32
  %v1112 = vpop.permute.xlu0 %1111
  %v1114 = vadd.f32 %v1104, %v1112
  %v1115 = vtanh.pop %v1114
  %1117 = vrot.lane.b32.xlu0 %v1115, 64
  %v1118 = vpop.permute.xlu0 %1117
  %v1120 = vmul.f32 %v1101, %v1118
  %1122 = vrot.lane.b32.xlu0 %v1057, 32
  %v1123 = vpop.permute.xlu0 %1122
  %1126 = vrot.lane.b32.xlu0 %v1120, 64
  %v1127 = vpop.permute.xlu0 %1126
  %v1129 = vsel %vm127, %v1123, %v1127
  %v1131 = vsel %vm198, %v1129, 0
  %1133 = vmatpush.msra.mxu0 0.0
  %1134 = vmatpush.msra.mxu0 0.0
  %1135 = vmatpush.msra.mxu0 0.0
  %1136 = vmatpush.msra.mxu0 0.0
  %1137 = vmatpush.msra.mxu0 0.0
  %1138 = vmatpush.msra.mxu0 0.0
  %1139 = vmatpush.msra.mxu0 0.0
  %1140 = vmatpush.msra.mxu0 0.0
  %1141 = vmatpush.msra.mxu0 %v125
  %1142 = vmatpush.msra.mxu0 %v124
  %1143 = vmatpush.msra.mxu0 %v123
  %1144 = vmatpush.msra.mxu0 %v122
  %1145 = vmatpush.msra.mxu0 %v121
  %1146 = vmatpush.msra.mxu0 %v120
  %1147 = vmatpush.msra.mxu0 %v119
  %1148 = vmatpush.msra.mxu0 %v118
  %1149 = vmatmul.f32.gmra.mxu0 %v1131
  %v1150 = vpop.f32.mrf.mxu0
  %v1151 = vadd.f32 %v196, %v1150
  %1152 = vdwg.mxu0
  %v1153 = vxor.u32 %v1151, 2147483648
  %v1154 = vmul.f32 %v1153, 1.442695
  %v1155 = vpow.pop %v1154
  %v1156 = vadd.f32 %v1155, 1.0
  %v1157 = vrcp.pop %v1156
  %v1158 = vmul.f32 %v1156, %v1157
  %v1159 = vsub.f32 1.0, %v1158
  %v1160 = vmul.f32 %v1157, %v1159
  %v1161 = vadd.f32 %v1157, %v1160
  %vm1162 = vweird.f32 %v1156
  %vm1163 = vweird.f32 %v1157
  %vm1164 = vmor %vm1162, %vm1163
  %v1165 = vsel %vm1164, %v1157, %v1161
  %v1166 = vand.u32 2147483647, %v1156
  %vm1167 = vcmp.eq.f32.partialorder %v1166, 8.507059e+37
  %v1168 = vand.u32 %v1156, 2147483648
  %v1169 = vor.u32 1.1754944e-38, %v1168
  %v1170 = vsel %vm1167, %v1169, %v1165
  %v1171 = vmul.f32 1.0, %v1170
  %v1172 = vmul.f32 %v1171, 2.0
  %v1173 = vsub.f32 %v1172, 1.0
  %v1174 = vmul.f32 %v1171, %v1051
  %1176 = vrot.lane.b32.xlu0 %v1173, 64
  %v1177 = vpop.permute.xlu0 %1176
  %v1179 = vmul.f32 %v1171, %v1177
  %1181 = vrot.lane.b32.xlu0 %v1179, 32
  %v1182 = vpop.permute.xlu0 %1181
  %v1184 = vadd.f32 %v1174, %v1182
  %v1185 = vtanh.pop %v1184
  %1187 = vrot.lane.b32.xlu0 %v1185, 64
  %v1188 = vpop.permute.xlu0 %1187
  %v1190 = vmul.f32 %v1171, %v1188
  %v1191 = vld [vmem:[%s6] sm:$0x1]
  %v1193 = vperm.slane %v1191, 0
  %1194 = vrot.lane.b32.xlu0 %v1193, 96
  %v1195 = vpop.permute.xlu0 %1194
  %v1197 = vmul.f32 %v1190, %v1195
  %1199 = vrot.lane.b32.xlu0 %v1197, 32
  %v1200 = vpop.permute.xlu0 %1199
  %v1202 = vsel %vm127, %v1200, 0.0
  %1203 = vadd.xlane.f32.xlu0 %v1202
  %v1204 = vpop.xlane.xlu0 %1203
  %v1205 = vld [vmem:[#allocation2] sm:$0x1]
  %v1207 = vperm.slane %v1205, 0
  %v1209 = vadd.f32 %v1204, %v1207
  %vm1210 = vcmask 7168
  %1211 = vst.msk [vmem:[%s8] sm:$0xff] %vm1210, %v1209
  // Predicated region
  $region34: #{lstm_forward.1} parent=0 // pred_check
    _
  $region35: #{lstm_forward.1} parent=0 // pred_check_branch
    %1213 = sbr.rel (0) target = $region37
  $region36: #{lstm_forward.1} parent=0 // pred_region
    _
  $region37: #{lstm_forward.1} parent=0 // pred_fallthru
    _
  // Predicated region
  $region38: #{lstm_forward.1} parent=0 // pred_check
    _
  $region39: #{lstm_forward.1} parent=0 // pred_check_branch
    %1215 = sbr.rel (0) target = $region41
  $region40: #{lstm_forward.1} parent=0 // pred_region
    _
  $region41: #{lstm_forward.1} parent=0 // pred_fallthru
    _

</llo_original>
